<compile_context>
chip_gen: v6e
topology: v6e:2x2x1
jax: 0.10.0
libtpu: 0.0.40
codegen_flags: <defaults>
</compile_context>

<pallas_src>
import jax
import jax.numpy as jnp
from jax import lax
from jax.experimental import pallas as pl
from jax.experimental.pallas import tpu as pltpu

# ---- problem sizes (small, consistent with the module's forward) ----
B = 2
C = 4              # in_channels
HID = 32           # hidden_channels (scaled down from default 128)
H = W = 16
HW = H * W         # 256 pixels -> lane dimension (2 x 128 lanes)
KS = 7             # SpatialAttention conv kernel size
PAD = KS // 2
QCHUNK = 128       # query rows per softmax chunk (lane aligned)
NCHUNKS = HW // QCHUNK
SCALE = 1.0 / (HID ** 0.5)


def reinforce_attention_kernel(alpha_ref,                      # SMEM (1,)
                               x_ref, wqkv_ref, bqkv_ref,      # VMEM inputs
                               wo_ref, bo_ref, mcat_ref,
                               o_ref,                          # VMEM output
                               q_sc, out_sc):                  # VMEM scratch
    x = x_ref[...]                                             # (C, HW) f32

    # Fused 1x1 QKV conv: one (3*HID, C) @ (C, HW) MXU matmul + bias.
    qkv = jnp.dot(wqkv_ref[...], x,
                  preferred_element_type=jnp.float32) + bqkv_ref[...]  # (3*HID, HW)
    q_sc[...] = qkv[0:HID] * SCALE          # fold 1/sqrt(HID) into Q once
    k = qkv[HID:2 * HID]                    # (HID, HW), loop-invariant
    v = qkv[2 * HID:3 * HID]                # (HID, HW), loop-invariant

    # Attention over pixels, chunked over query rows to bound live vregs.
    def chunk_body(ci, carry):
        off = pl.multiple_of(ci * QCHUNK, QCHUNK)
        qc = q_sc[:, pl.ds(off, QCHUNK)]                       # (HID, QCHUNK)
        # scores[p, kv] = sum_h q[h, p] * k[h, kv]  (contract hidden dim 0/0)
        s = lax.dot_general(qc, k, (((0,), (0,)), ((), ())),
                            preferred_element_type=jnp.float32)  # (QCHUNK, HW)
        s = s - jnp.max(s, axis=-1, keepdims=True)
        e = jnp.exp(s)
        d = jnp.sum(e, axis=-1, keepdims=True)                   # (QCHUNK, 1)
        inv = pl.reciprocal(d, approx=True)      # EUP slot (free)
        inv = inv * (2.0 - d * inv)              # one Newton step -> f32 exact
        attn = e * inv
        # out[h, p] = sum_kv v[h, kv] * attn[p, kv]
        oc = lax.dot_general(v, attn, (((1,), (1,)), ((), ())),
                             preferred_element_type=jnp.float32)  # (HID, QCHUNK)
        out_sc[:, pl.ds(off, QCHUNK)] = oc
        return carry

    lax.fori_loop(0, NCHUNKS, chunk_body, 0)

    # out_proj (1x1 conv) + reinforcement blend (alpha buffer, init 1.0).
    proj = jnp.dot(wo_ref[...], out_sc[...],
                   preferred_element_type=jnp.float32) + bo_ref[...]    # (C, HW)
    alpha = alpha_ref[0]
    y = alpha * proj + (1.0 - alpha) * x                                # (C, HW)

    # SpatialAttention (CBAM) as one matmul: conv = [avg | max] @ mcat.
    avg = jnp.mean(y, axis=0, keepdims=True)                            # (1, HW)
    mx = jnp.max(y, axis=0, keepdims=True)                              # (1, HW)
    pooled = jnp.concatenate([avg, mx], axis=1)                         # (1, 2*HW)
    conv = jnp.dot(pooled, mcat_ref[...],
                   preferred_element_type=jnp.float32)                  # (1, HW)
    gate = jax.nn.sigmoid(conv)
    o_ref[...] = (y * gate).astype(o_ref.dtype)


def _spatial_conv_matrix(wsa):
    """(2, KS, KS) CBAM weights -> (2*HW, HW) matrix so that the zero-padded
    7x7 conv over the [avg, max] pooled maps becomes `[avg | max] @ M`.
    Weight-only transform (no input data involved), built once per call."""
    ri = jnp.arange(HW, dtype=jnp.int32) // W
    rj = jnp.arange(HW, dtype=jnp.int32) % W
    di = ri[:, None] - ri[None, :] + PAD       # (source q, dest p) row offset
    dj = rj[:, None] - rj[None, :] + PAD
    valid = (di >= 0) & (di < KS) & (dj >= 0) & (dj < KS)
    di_c = jnp.clip(di, 0, KS - 1)
    dj_c = jnp.clip(dj, 0, KS - 1)
    m_avg = jnp.where(valid, wsa[0][di_c, dj_c], 0.0)     # (HW, HW)
    m_max = jnp.where(valid, wsa[1][di_c, dj_c], 0.0)
    return jnp.concatenate([m_avg, m_max], axis=0).astype(jnp.float32)  # (2*HW, HW)


@jax.jit
def reinforce_attention(x_nchw, p):
    x_flat = x_nchw.reshape(B, C, HW).astype(jnp.float32)   # free reshape, no transpose
    wqkv = jnp.concatenate([p["wq"], p["wk"], p["wv"]], axis=0)            # (3*HID, C)
    bqkv = jnp.concatenate([p["bq"], p["bk"], p["bv"]], axis=0)[:, None]   # (3*HID, 1)
    bo = p["bo"][:, None]                                                  # (C, 1)
    mcat = _spatial_conv_matrix(p["wsa"])                                  # (2*HW, HW)

    grid_spec = pltpu.PrefetchScalarGridSpec(
        num_scalar_prefetch=0,
        grid=(B,),
        in_specs=[
            pl.BlockSpec(memory_space=pltpu.MemorySpace.SMEM),       # alpha (1,)
            pl.BlockSpec((None, C, HW), lambda b: (b, 0, 0)),        # x
            pl.BlockSpec((3 * HID, C), lambda b: (0, 0)),            # fused Wqkv
            pl.BlockSpec((3 * HID, 1), lambda b: (0, 0)),            # fused bqkv
            pl.BlockSpec((C, HID), lambda b: (0, 0)),                # Wo
            pl.BlockSpec((C, 1), lambda b: (0, 0)),                  # bo
            pl.BlockSpec((2 * HW, HW), lambda b: (0, 0)),            # stencil matrix
        ],
        out_specs=pl.BlockSpec((None, C, HW), lambda b: (b, 0, 0)),
        scratch_shapes=[pltpu.VMEM((HID, HW), jnp.float32),          # scaled Q
                        pltpu.VMEM((HID, HW), jnp.float32)],         # attn output
    )

    out = pl.pallas_call(
        reinforce_attention_kernel,
        out_shape=jax.ShapeDtypeStruct((B, C, HW), jnp.float32),
        grid_spec=grid_spec,
        compiler_params=pltpu.CompilerParams(
            dimension_semantics=("parallel",)),   # v7x: batches across both TCs
    )(p["alpha"], x_flat, wqkv, bqkv, p["wo"], bo, mcat)

    return out.reshape(B, C, H, W)


def init_params(key):
    ks = jax.random.split(key, 9)
    s = 0.1
    return dict(
        wq=s * jax.random.normal(ks[0], (HID, C), jnp.float32),
        bq=s * jax.random.normal(ks[1], (HID,), jnp.float32),
        wk=s * jax.random.normal(ks[2], (HID, C), jnp.float32),
        bk=s * jax.random.normal(ks[3], (HID,), jnp.float32),
        wv=s * jax.random.normal(ks[4], (HID, C), jnp.float32),
        bv=s * jax.random.normal(ks[5], (HID,), jnp.float32),
        wo=s * jax.random.normal(ks[6], (C, HID), jnp.float32),
        bo=s * jax.random.normal(ks[7], (C,), jnp.float32),
        wsa=s * jax.random.normal(ks[8], (2, KS, KS), jnp.float32),  # [avg, max] 7x7
        alpha=jnp.array([1.0], jnp.float32),       # buffer 'alpha' initial value
    )


def reference(x_nchw, p):
    # pure-JAX reference mirroring the PyTorch forward (NCHW-native)
    x = x_nchw.reshape(B, C, HW).astype(jnp.float32)          # (B, C, HW)

    def conv1x1(w, b, inp):                                   # w (O, I), b (O,)
        return jnp.einsum("oi,bip->bop", w, inp) + b[None, :, None]

    q = conv1x1(p["wq"], p["bq"], x)                          # (B, HID, HW)
    k = conv1x1(p["wk"], p["bk"], x)
    v = conv1x1(p["wv"], p["bv"], x)
    attn = jax.nn.softmax(
        jnp.einsum("bhp,bhq->bpq", q, k) / (HID ** 0.5), axis=-1)
    out = jnp.einsum("bpq,bhq->bhp", attn, v)                 # (B, HID, HW)
    out = conv1x1(p["wo"], p["bo"], out)                      # (B, C, HW)
    alpha = p["alpha"][0]
    y = (alpha * out + (1.0 - alpha) * x).reshape(B, C, H, W)

    avg = jnp.mean(y, axis=1)                                 # (B, H, W)
    mx = jnp.max(y, axis=1)
    sa = jnp.stack([avg, mx], axis=-1)                        # (B, H, W, 2)
    pad = jnp.pad(sa, ((0, 0), (PAD, PAD), (PAD, PAD), (0, 0)))
    conv = jnp.zeros((B, H, W), jnp.float32)
    for di in range(KS):
        for dj in range(KS):
            conv = conv + pad[:, di:di + H, dj:dj + W, 0] * p["wsa"][0, di, dj]
            conv = conv + pad[:, di:di + H, dj:dj + W, 1] * p["wsa"][1, di, dj]
    return y * jax.nn.sigmoid(conv)[:, None, :, :]


if __name__ == "__main__":
    key = jax.random.PRNGKey(0)
    kx, kp = jax.random.split(key)
    x = jax.random.normal(kx, (B, C, H, W), jnp.float32)
    params = init_params(kp)

    out = jax.block_until_ready(reinforce_attention(x, params))
    ref = reference(x, params)

    assert out.shape == (B, C, H, W)
    err = float(jnp.max(jnp.abs(out - ref)))
    assert jnp.allclose(out, ref, atol=1e-3, rtol=1e-3), f"max abs err {err}"

    print("KERNEL_OK")
</pallas_src>

<mosaic_0001>
module attributes {stable_mosaic.version = 11 : i64} {
  func.func @reinforce_attention_kernel(%arg0: i32, %arg1: memref<1xf32, #tpu.memory_space<smem>>, %arg2: memref<1x4x256xf32, #tpu.memory_space<vmem>>, %arg3: memref<96x4xf32, #tpu.memory_space<vmem>>, %arg4: memref<96x1xf32, #tpu.memory_space<vmem>>, %arg5: memref<4x32xf32, #tpu.memory_space<vmem>>, %arg6: memref<4x1xf32, #tpu.memory_space<vmem>>, %arg7: memref<512x256xf32, #tpu.memory_space<vmem>>, %arg8: memref<1x4x256xf32, #tpu.memory_space<vmem>>, %arg9: memref<32x256xf32, #tpu.memory_space<vmem>>, %arg10: memref<32x256xf32, #tpu.memory_space<vmem>>) attributes {dimension_semantics = [#tpu.dimension_semantics<parallel>], iteration_bounds = array<i64: 2>, scalar_prefetch = 0 : i64, scratch_operands = 2 : i64, tpu.core_type = #tpu.core_type<tc>, window_params = [{transform_indices = @transform_0, window_bounds = array<i64: 1>}, {transform_indices = @transform_1, window_bounds = array<i64: 1, 4, 256>}, {pipeline_mode = #tpu.pipeline_mode<synchronous>, transform_indices = @transform_2, window_bounds = array<i64: 96, 4>}, {pipeline_mode = #tpu.pipeline_mode<synchronous>, transform_indices = @transform_3, window_bounds = array<i64: 96, 1>}, {pipeline_mode = #tpu.pipeline_mode<synchronous>, transform_indices = @transform_4, window_bounds = array<i64: 4, 32>}, {pipeline_mode = #tpu.pipeline_mode<synchronous>, transform_indices = @transform_5, window_bounds = array<i64: 4, 1>}, {pipeline_mode = #tpu.pipeline_mode<synchronous>, transform_indices = @transform_6, window_bounds = array<i64: 512, 256>}, {transform_indices = @transform_7, window_bounds = array<i64: 1, 4, 256>}]} {
    %c0 = arith.constant 0 : index
    %c0_0 = arith.constant 0 : index
    %c0_1 = arith.constant 0 : index
    %0 = vector.load %arg2[%c0, %c0_0, %c0_1] : memref<1x4x256xf32, #tpu.memory_space<vmem>>, vector<1x4x256xf32>
    %1 = vector.shape_cast %0 : vector<1x4x256xf32> to vector<4x256xf32>
    %c0_2 = arith.constant 0 : index
    %c0_3 = arith.constant 0 : index
    %2 = vector.load %arg3[%c0_2, %c0_3] : memref<96x4xf32, #tpu.memory_space<vmem>>, vector<96x4xf32>
    %cst = arith.constant dense<0.000000e+00> : vector<96x256xf32>
    %3 = tpu.matmul %2, %1, %cst {dimension_numbers = #tpu.dot_dimension_numbers<[1], [0], [0], [1], [0, 0, 1, 1], [], []>} : vector<96x4xf32>, vector<4x256xf32>, vector<96x256xf32> -> vector<96x256xf32>
    %c0_4 = arith.constant 0 : index
    %c0_5 = arith.constant 0 : index
    %4 = vector.load %arg4[%c0_4, %c0_5] : memref<96x1xf32, #tpu.memory_space<vmem>>, vector<96x1xf32>
    %5 = vector.broadcast %4 : vector<96x1xf32> to vector<96x256xf32>
    %6 = arith.addf %3, %5 : vector<96x256xf32>
    %7 = vector.extract_strided_slice %6 {offsets = [0, 0], sizes = [32, 256], strides = [1, 1]} : vector<96x256xf32> to vector<32x256xf32>
    %cst_6 = arith.constant 0.176776692 : f32
    %8 = vector.broadcast %cst_6 : f32 to vector<32x256xf32>
    %9 = arith.mulf %7, %8 : vector<32x256xf32>
    %c0_7 = arith.constant 0 : index
    %c0_8 = arith.constant 0 : index
    %10 = vector.load %arg9[%c0_7, %c0_8] : memref<32x256xf32, #tpu.memory_space<vmem>>, vector<32x256xf32>
    tpu.vector_store %arg9[%c0_7, %c0_8], %9 {strides = array<i32>} : memref<32x256xf32, #tpu.memory_space<vmem>>, vector<32x256xf32>,
    %11 = vector.extract_strided_slice %6 {offsets = [32, 0], sizes = [32, 256], strides = [1, 1]} : vector<96x256xf32> to vector<32x256xf32>
    %12 = vector.extract_strided_slice %6 {offsets = [64, 0], sizes = [32, 256], strides = [1, 1]} : vector<96x256xf32> to vector<32x256xf32>
    %c0_i32 = arith.constant 0 : i32
    %c2_i32 = arith.constant 2 : i32
    %13 = arith.addi %c0_i32, %c2_i32 : i32
    %c1_i32 = arith.constant 1 : i32
    scf.for %arg11 = %c0_i32 to %13 step %c1_i32  : i32 {
      %c128_i32 = arith.constant 128 : i32
      %46 = arith.muli %arg11, %c128_i32 : i32
      %47 = tpu.assume_multiple %46, 128 : i32
      %c0_29 = arith.constant 0 : index
      %48 = arith.index_cast %47 : i32 to index
      %49 = vector.load %arg9[%c0_29, %48] : memref<32x256xf32, #tpu.memory_space<vmem>>, vector<32x128xf32>
      %cst_30 = arith.constant dense<0.000000e+00> : vector<128x256xf32>
      %50 = tpu.matmul %49, %11, %cst_30 {dimension_numbers = #tpu.dot_dimension_numbers<[0], [0], [1], [1], [0, 1, 1, 1], [], []>} : vector<32x128xf32>, vector<32x256xf32>, vector<128x256xf32> -> vector<128x256xf32>
      %cst_31 = arith.constant dense<0xFF800000> : vector<128xf32>
      %51 = vector.multi_reduction <maximumf>, %50, %cst_31 [1] : vector<128x256xf32> to vector<128xf32>
      %52 = vector.shape_cast %51 : vector<128xf32> to vector<128x1xf32>
      %53 = vector.broadcast %52 : vector<128x1xf32> to vector<128x256xf32>
      %54 = arith.subf %50, %53 : vector<128x256xf32>
      %55 = math.exp %54 : vector<128x256xf32>
      %cst_32 = arith.constant dense<0.000000e+00> : vector<128xf32>
      %56 = vector.multi_reduction <add>, %55, %cst_32 [1] : vector<128x256xf32> to vector<128xf32>
      %57 = vector.shape_cast %56 : vector<128xf32> to vector<128x1xf32>
      %58 = tpu.reciprocal %57 {approx = true} : vector<128x1xf32> -> vector<128x1xf32>
      %59 = arith.mulf %57, %58 : vector<128x1xf32>
      %cst_33 = arith.constant 2.000000e+00 : f32
      %60 = vector.broadcast %cst_33 : f32 to vector<128x1xf32>
      %61 = arith.subf %60, %59 : vector<128x1xf32>
      %62 = arith.mulf %58, %61 : vector<128x1xf32>
      %63 = vector.broadcast %62 : vector<128x1xf32> to vector<128x256xf32>
      %64 = arith.mulf %55, %63 : vector<128x256xf32>
      %cst_34 = arith.constant dense<0.000000e+00> : vector<32x128xf32>
      %65 = tpu.matmul %12, %64, %cst_34 {dimension_numbers = #tpu.dot_dimension_numbers<[1], [1], [0], [0], [0, 0, 1, 0], [], []>} : vector<32x256xf32>, vector<128x256xf32>, vector<32x128xf32> -> vector<32x128xf32>
      %c0_35 = arith.constant 0 : index
      %66 = arith.index_cast %47 : i32 to index
      %67 = vector.load %arg10[%c0_35, %66] : memref<32x256xf32, #tpu.memory_space<vmem>>, vector<32x128xf32>
      tpu.vector_store %arg10[%c0_35, %66], %65 {strides = array<i32>} : memref<32x256xf32, #tpu.memory_space<vmem>>, vector<32x128xf32>,
    }
    %c2_i32_9 = arith.constant 2 : i32
    %c0_10 = arith.constant 0 : index
    %c0_11 = arith.constant 0 : index
    %14 = vector.load %arg5[%c0_10, %c0_11] : memref<4x32xf32, #tpu.memory_space<vmem>>, vector<4x32xf32>
    %c0_12 = arith.constant 0 : index
    %c0_13 = arith.constant 0 : index
    %15 = vector.load %arg10[%c0_12, %c0_13] : memref<32x256xf32, #tpu.memory_space<vmem>>, vector<32x256xf32>
    %cst_14 = arith.constant dense<0.000000e+00> : vector<4x256xf32>
    %16 = tpu.matmul %14, %15, %cst_14 {dimension_numbers = #tpu.dot_dimension_numbers<[1], [0], [0], [1], [0, 0, 1, 1], [], []>} : vector<4x32xf32>, vector<32x256xf32>, vector<4x256xf32> -> vector<4x256xf32>
    %c0_15 = arith.constant 0 : index
    %c0_16 = arith.constant 0 : index
    %17 = vector.load %arg6[%c0_15, %c0_16] : memref<4x1xf32, #tpu.memory_space<vmem>>, vector<4x1xf32>
    %18 = vector.broadcast %17 : vector<4x1xf32> to vector<4x256xf32>
    %19 = arith.addf %16, %18 : vector<4x256xf32>
    %c0_17 = arith.constant 0 : index
    %20 = memref.load %arg1[%c0_17] : memref<1xf32, #tpu.memory_space<smem>>
    %21 = vector.broadcast %20 : f32 to vector<4x256xf32>
    %22 = arith.mulf %21, %19 : vector<4x256xf32>
    %cst_18 = arith.constant 1.000000e+00 : f32
    %23 = arith.subf %cst_18, %20 : f32
    %24 = vector.broadcast %23 : f32 to vector<4x256xf32>
    %25 = arith.mulf %24, %1 : vector<4x256xf32>
    %26 = arith.addf %22, %25 : vector<4x256xf32>
    %cst_19 = arith.constant dense<0.000000e+00> : vector<256xf32>
    %27 = vector.multi_reduction <add>, %26, %cst_19 [0] : vector<4x256xf32> to vector<256xf32>
    %28 = vector.shape_cast %27 : vector<256xf32> to vector<1x256xf32>
    %cst_20 = arith.constant 4.000000e+00 : f32
    %29 = vector.broadcast %cst_20 : f32 to vector<1x256xf32>
    %30 = arith.divf %28, %29 : vector<1x256xf32>
    %cst_21 = arith.constant dense<0xFF800000> : vector<256xf32>
    %31 = vector.multi_reduction <maximumf>, %26, %cst_21 [0] : vector<4x256xf32> to vector<256xf32>
    %32 = vector.shape_cast %31 : vector<256xf32> to vector<1x256xf32>
    %33 = tpu.concatenate %30, %32 in 1 : vector<1x256xf32>, vector<1x256xf32> -> vector<1x512xf32>
    %c0_22 = arith.constant 0 : index
    %c0_23 = arith.constant 0 : index
    %34 = vector.load %arg7[%c0_22, %c0_23] : memref<512x256xf32, #tpu.memory_space<vmem>>, vector<512x256xf32>
    %cst_24 = arith.constant dense<0.000000e+00> : vector<1x256xf32>
    %35 = tpu.matmul %33, %34, %cst_24 {dimension_numbers = #tpu.dot_dimension_numbers<[1], [0], [0], [1], [0, 0, 1, 1], [], []>} : vector<1x512xf32>, vector<512x256xf32>, vector<1x256xf32> -> vector<1x256xf32>
    %36 = arith.negf %35 : vector<1x256xf32>
    %37 = math.exp %36 : vector<1x256xf32>
    %cst_25 = arith.constant 1.000000e+00 : f32
    %38 = vector.broadcast %cst_25 : f32 to vector<1x256xf32>
    %39 = arith.addf %38, %37 : vector<1x256xf32>
    %40 = arith.divf %38, %39 : vector<1x256xf32>
    %41 = vector.broadcast %40 : vector<1x256xf32> to vector<4x256xf32>
    %42 = arith.mulf %26, %41 : vector<4x256xf32>
    %c0_26 = arith.constant 0 : index
    %c0_27 = arith.constant 0 : index
    %c0_28 = arith.constant 0 : index
    %43 = vector.load %arg8[%c0_26, %c0_27, %c0_28] : memref<1x4x256xf32, #tpu.memory_space<vmem>>, vector<1x4x256xf32>
    %44 = vector.shape_cast %43 : vector<1x4x256xf32> to vector<4x256xf32>
    %45 = vector.shape_cast %42 : vector<4x256xf32> to vector<1x4x256xf32>
    tpu.vector_store %arg8[%c0_26, %c0_27, %c0_28], %45 {strides = array<i32>} : memref<1x4x256xf32, #tpu.memory_space<vmem>>, vector<1x4x256xf32>,
    return
  }
  func.func @transform_0(%arg0: i32) -> i32 {
    %c0_i32 = arith.constant 0 : i32
    %c0_i32_0 = arith.constant 0 : i32
    return %c0_i32 : i32
  }
  func.func @transform_1(%arg0: i32) -> (i32, i32, i32) {
    %c0_i32 = arith.constant 0 : i32
    %c0_i32_0 = arith.constant 0 : i32
    %c0_i32_1 = arith.constant 0 : i32
    return %arg0, %c0_i32, %c0_i32_0 : i32, i32, i32
  }
  func.func @transform_2(%arg0: i32) -> (i32, i32) {
    %c0_i32 = arith.constant 0 : i32
    %c0_i32_0 = arith.constant 0 : i32
    %c0_i32_1 = arith.constant 0 : i32
    return %c0_i32, %c0_i32_0 : i32, i32
  }
  func.func @transform_3(%arg0: i32) -> (i32, i32) {
    %c0_i32 = arith.constant 0 : i32
    %c0_i32_0 = arith.constant 0 : i32
    %c0_i32_1 = arith.constant 0 : i32
    return %c0_i32, %c0_i32_0 : i32, i32
  }
  func.func @transform_4(%arg0: i32) -> (i32, i32) {
    %c0_i32 = arith.constant 0 : i32
    %c0_i32_0 = arith.constant 0 : i32
    %c0_i32_1 = arith.constant 0 : i32
    return %c0_i32, %c0_i32_0 : i32, i32
  }
  func.func @transform_5(%arg0: i32) -> (i32, i32) {
    %c0_i32 = arith.constant 0 : i32
    %c0_i32_0 = arith.constant 0 : i32
    %c0_i32_1 = arith.constant 0 : i32
    return %c0_i32, %c0_i32_0 : i32, i32
  }
  func.func @transform_6(%arg0: i32) -> (i32, i32) {
    %c0_i32 = arith.constant 0 : i32
    %c0_i32_0 = arith.constant 0 : i32
    %c0_i32_1 = arith.constant 0 : i32
    return %c0_i32, %c0_i32_0 : i32, i32
  }
  func.func @transform_7(%arg0: i32) -> (i32, i32, i32) {
    %c0_i32 = arith.constant 0 : i32
    %c0_i32_0 = arith.constant 0 : i32
    %c0_i32_1 = arith.constant 0 : i32
    return %arg0, %c0_i32, %c0_i32_0 : i32, i32, i32
  }
}

</mosaic_0001>

<llo_original>
// kernel: reinforce_attention.1
$region0: #{reinforce_attention.1}
  #allocation0 [shape = 'u32[]', space=smem, size = 0x4, offset = 0x4, fixed_abs, tag = 'smem constant byte address 0x4 - core index']
  #allocation1 [shape = 'u32[144,128]{1,0:T(1,128)}', space=vmem, size = 0x12000, scoped, tag = 'internal scratch']
  #allocation2 [shape = 'f32[32,256]{1,0:T(8,128)}', space=vmem, size = 0x8000, scoped, tag = 'scratch operand']
  #allocation3 [shape = 'f32[32,256]{1,0:T(8,128)}', space=vmem, size = 0x8000, scoped, tag = 'scratch operand']
  #allocation4 [shape = 'f32[1]{0:T(128)S(6)}', space=smem, size = 0x200, scoped, tag = 'scoped memory for reinforce_attention.1']
  %s0 = inlined_call_operand.<no memory space> [shape: f32[1], index: 0, kind: input, shape index: {}]
  %s1 = inlined_call_operand.vmem [shape: f32[2,4,256], index: 1, kind: input, shape index: {}]
  %s2 = inlined_call_operand.vmem [shape: f32[96,4], index: 2, kind: input, shape index: {}]
  %s3 = inlined_call_operand.vmem [shape: f32[96,1], index: 3, kind: input, shape index: {}]
  %s4 = inlined_call_operand.vmem [shape: f32[4,32], index: 4, kind: input, shape index: {}]
  %s5 = inlined_call_operand.vmem [shape: f32[4,1], index: 5, kind: input, shape index: {}]
  %s6 = inlined_call_operand.vmem [shape: f32[512,256], index: 6, kind: input, shape index: {}]
  %s7 = inlined_call_operand.vmem [shape: f32[2,4,256], index: 7, kind: output, shape index: {}]
  %s8 = sld [smem:[#allocation0]]
  $region68: #{reinforce_attention.1} parent=0
    _
  %s10 = ssub.s32 1, %s8
  %s11 = scalar_select 0, %s10, %s8
  %12 = sst [smem:[#allocation4]] %s0
  loop: start=0, step=1, limit=4
  $region2: #{reinforce_attention.1} parent=0 // loop_pre_header
    _
  $region3: #{reinforce_attention.1} parent=0 // loop_header
    %s14 = sphi 0, %s18
    %p15 = scmp.ge.s32.totalorder %s14, 4
    %s22 = sphi 0, %s22
    %s24 = sphi 0, %s22
    %s25 = sphi 0, %s24
    %s39 = sphi 0, %s25
    %s45 = sphi 0, %s47
    %s48 = sphi 0, %s45
    %s49 = sphi 0, %s48
    %s65 = sphi 0, %s49
    %s69 = sphi 0, %s69
    %s71 = sphi 0, %s69
    %s72 = sphi 0, %s71
    %s86 = sphi 0, %s72
    %s90 = sphi 0, %s90
    %s92 = sphi 0, %s90
    %s93 = sphi 0, %s92
    %s107 = sphi 0, %s93
    %s111 = sphi 0, %s111
    %s113 = sphi 0, %s111
    %s114 = sphi 0, %s113
    %s128 = sphi 0, %s114
    %s132 = sphi 0, %s132
    %s134 = sphi 0, %s132
    %s135 = sphi 0, %s134
    %s149 = sphi 0, %s135
    %s153 = sphi 0, %s153
    %s155 = sphi 0, %s153
    %s156 = sphi 0, %s155
    %s170 = sphi 0, %s156
    %s176 = sphi 0, %s178
    %s179 = sphi 0, %s176
    %s180 = sphi 0, %s179
    %s196 = sphi 0, %s180
  $region4: #{reinforce_attention.1} parent=0 // loop_header_branch
    %17 = sbr.rel (%p15) target = $region8
  $region5: #{reinforce_attention.1} parent=0 // loop_body
    %s19 = ssub.s32 %s14, 1
    %s20 = ssub.s32 %s14, 2
    %s21 = sadd.s32 %s14, 1
    %s23 = sadd.s32 %s22, 1
    %p26 = scmp.eq.s32.totalorder %s14, 1
    %p27 = scmp.ne.s32.totalorder %s22, %s24
    %p28 = scmp.eq.s32.totalorder %s14, 0
    %p29 = por %p27, %p28
    %p30 = scmp.ne.s32.totalorder %s22, %s24
    %p31 = scmp.eq.s32.totalorder %s19, 1
    %p32 = por %p30, %p31
    %p33 = scmp.ne.s32.totalorder %s24, %s25
    %p34 = scmp.eq.s32.totalorder %s19, 0
    %p35 = por %p33, %p34
    %p36 = scmp.ne.s32.totalorder %s24, %s25
    %p37 = scmp.eq.s32.totalorder %s20, 1
    %p38 = por %p36, %p37
    %p40 = scmp.ne.s32.totalorder %s25, %s39
    %p41 = scmp.eq.s32.totalorder %s20, 0
    %p42 = por %p40, %p41
    %s43 = ssub.s32 %s14, %s21
    %p44 = scmp.eq.s32.totalorder %s43, 0
    %s46 = sadd.s32 %s45, 1
    %s47 = scalar_select %p44, %s45, %s46
    %p50 = pneg %p44
    %p51 = scmp.eq.s32.totalorder %s14, 1
    %p52 = por %p50, %p51
    %p53 = scmp.ne.s32.totalorder %s45, %s48
    %p54 = scmp.eq.s32.totalorder %s14, 0
    %p55 = por %p53, %p54
    %p56 = scmp.ne.s32.totalorder %s45, %s48
    %p57 = scmp.eq.s32.totalorder %s19, 1
    %p58 = por %p56, %p57
    %p59 = scmp.ne.s32.totalorder %s48, %s49
    %p60 = scmp.eq.s32.totalorder %s19, 0
    %p61 = por %p59, %p60
    %p62 = scmp.ne.s32.totalorder %s48, %s49
    %p63 = scmp.eq.s32.totalorder %s20, 1
    %p64 = por %p62, %p63
    %p66 = scmp.ne.s32.totalorder %s49, %s65
    %p67 = scmp.eq.s32.totalorder %s20, 0
    %p68 = por %p66, %p67
    %s70 = sadd.s32 %s69, 1
    %p73 = scmp.eq.s32.totalorder %s14, 1
    %p74 = scmp.ne.s32.totalorder %s69, %s71
    %p75 = scmp.eq.s32.totalorder %s14, 0
    %p76 = por %p74, %p75
    %p77 = scmp.ne.s32.totalorder %s69, %s71
    %p78 = scmp.eq.s32.totalorder %s19, 1
    %p79 = por %p77, %p78
    %p80 = scmp.ne.s32.totalorder %s71, %s72
    %p81 = scmp.eq.s32.totalorder %s19, 0
    %p82 = por %p80, %p81
    %p83 = scmp.ne.s32.totalorder %s71, %s72
    %p84 = scmp.eq.s32.totalorder %s20, 1
    %p85 = por %p83, %p84
    %p87 = scmp.ne.s32.totalorder %s72, %s86
    %p88 = scmp.eq.s32.totalorder %s20, 0
    %p89 = por %p87, %p88
    %s91 = sadd.s32 %s90, 1
    %p94 = scmp.eq.s32.totalorder %s14, 1
    %p95 = scmp.ne.s32.totalorder %s90, %s92
    %p96 = scmp.eq.s32.totalorder %s14, 0
    %p97 = por %p95, %p96
    %p98 = scmp.ne.s32.totalorder %s90, %s92
    %p99 = scmp.eq.s32.totalorder %s19, 1
    %p100 = por %p98, %p99
    %p101 = scmp.ne.s32.totalorder %s92, %s93
    %p102 = scmp.eq.s32.totalorder %s19, 0
    %p103 = por %p101, %p102
    %p104 = scmp.ne.s32.totalorder %s92, %s93
    %p105 = scmp.eq.s32.totalorder %s20, 1
    %p106 = por %p104, %p105
    %p108 = scmp.ne.s32.totalorder %s93, %s107
    %p109 = scmp.eq.s32.totalorder %s20, 0
    %p110 = por %p108, %p109
    %s112 = sadd.s32 %s111, 1
    %p115 = scmp.eq.s32.totalorder %s14, 1
    %p116 = scmp.ne.s32.totalorder %s111, %s113
    %p117 = scmp.eq.s32.totalorder %s14, 0
    %p118 = por %p116, %p117
    %p119 = scmp.ne.s32.totalorder %s111, %s113
    %p120 = scmp.eq.s32.totalorder %s19, 1
    %p121 = por %p119, %p120
    %p122 = scmp.ne.s32.totalorder %s113, %s114
    %p123 = scmp.eq.s32.totalorder %s19, 0
    %p124 = por %p122, %p123
    %p125 = scmp.ne.s32.totalorder %s113, %s114
    %p126 = scmp.eq.s32.totalorder %s20, 1
    %p127 = por %p125, %p126
    %p129 = scmp.ne.s32.totalorder %s114, %s128
    %p130 = scmp.eq.s32.totalorder %s20, 0
    %p131 = por %p129, %p130
    %s133 = sadd.s32 %s132, 1
    %p136 = scmp.eq.s32.totalorder %s14, 1
    %p137 = scmp.ne.s32.totalorder %s132, %s134
    %p138 = scmp.eq.s32.totalorder %s14, 0
    %p139 = por %p137, %p138
    %p140 = scmp.ne.s32.totalorder %s132, %s134
    %p141 = scmp.eq.s32.totalorder %s19, 1
    %p142 = por %p140, %p141
    %p143 = scmp.ne.s32.totalorder %s134, %s135
    %p144 = scmp.eq.s32.totalorder %s19, 0
    %p145 = por %p143, %p144
    %p146 = scmp.ne.s32.totalorder %s134, %s135
    %p147 = scmp.eq.s32.totalorder %s20, 1
    %p148 = por %p146, %p147
    %p150 = scmp.ne.s32.totalorder %s135, %s149
    %p151 = scmp.eq.s32.totalorder %s20, 0
    %p152 = por %p150, %p151
    %s154 = sadd.s32 %s153, 1
    %p157 = scmp.eq.s32.totalorder %s14, 1
    %p158 = scmp.ne.s32.totalorder %s153, %s155
    %p159 = scmp.eq.s32.totalorder %s14, 0
    %p160 = por %p158, %p159
    %p161 = scmp.ne.s32.totalorder %s153, %s155
    %p162 = scmp.eq.s32.totalorder %s19, 1
    %p163 = por %p161, %p162
    %p164 = scmp.ne.s32.totalorder %s155, %s156
    %p165 = scmp.eq.s32.totalorder %s19, 0
    %p166 = por %p164, %p165
    %p167 = scmp.ne.s32.totalorder %s155, %s156
    %p168 = scmp.eq.s32.totalorder %s20, 1
    %p169 = por %p167, %p168
    %p171 = scmp.ne.s32.totalorder %s156, %s170
    %p172 = scmp.eq.s32.totalorder %s20, 0
    %p173 = por %p171, %p172
    %s174 = ssub.s32 %s14, %s21
    %p175 = scmp.eq.s32.totalorder %s174, 0
    %s177 = sadd.s32 %s176, 1
    %s178 = scalar_select %p175, %s176, %s177
    %p181 = pneg %p175
    %p182 = scmp.eq.s32.totalorder %s14, 1
    %p183 = por %p181, %p182
    %p184 = scmp.ne.s32.totalorder %s176, %s179
    %p185 = scmp.eq.s32.totalorder %s14, 0
    %p186 = por %p184, %p185
    %p187 = scmp.ne.s32.totalorder %s176, %s179
    %p188 = scmp.eq.s32.totalorder %s19, 1
    %p189 = por %p187, %p188
    %p190 = scmp.ne.s32.totalorder %s179, %s180
    %p191 = scmp.eq.s32.totalorder %s19, 0
    %p192 = por %p190, %p191
    %p193 = scmp.ne.s32.totalorder %s179, %s180
    %p194 = scmp.eq.s32.totalorder %s20, 1
    %p195 = por %p193, %p194
    %p197 = scmp.ne.s32.totalorder %s180, %s196
    %p198 = scmp.eq.s32.totalorder %s20, 0
    %p199 = por %p197, %p198
    %p200 = scmp.le.s32.totalorder 1, %s14
    %p201 = scmp.lt.s32.totalorder %s14, 3
    %p202 = pnand %p200, %p201
    %p203 = pneg %p202
    // Predicated region
    $region9: #{reinforce_attention.1} parent=5 // pred_check
      _
    $region10: #{reinforce_attention.1} parent=5 // pred_check_branch
      %205 = sbr.rel (%p202) target = $region12
    $region11: #{reinforce_attention.1} parent=5 // pred_region
      %s206 = ssub.s32 %s14, 1
      // Predicated region
      $region13: #{reinforce_attention.1} parent=11 // pred_check
        %p207 = pneg %p35
      $region14: #{reinforce_attention.1} parent=11 // pred_check_branch
        %209 = sbr.rel (%p207) target = $region16
      $region15: #{reinforce_attention.1} parent=11 // pred_region
        _
      $region16: #{reinforce_attention.1} parent=11 // pred_fallthru
        _
      // Predicated region
      $region17: #{reinforce_attention.1} parent=11 // pred_check
        %p210 = pneg %p82
      $region18: #{reinforce_attention.1} parent=11 // pred_check_branch
        %212 = sbr.rel (%p210) target = $region20
      $region19: #{reinforce_attention.1} parent=11 // pred_region
        _
      $region20: #{reinforce_attention.1} parent=11 // pred_fallthru
        _
      // Predicated region
      $region21: #{reinforce_attention.1} parent=11 // pred_check
        %p213 = pneg %p103
      $region22: #{reinforce_attention.1} parent=11 // pred_check_branch
        %215 = sbr.rel (%p213) target = $region24
      $region23: #{reinforce_attention.1} parent=11 // pred_region
        _
      $region24: #{reinforce_attention.1} parent=11 // pred_fallthru
        _
      // Predicated region
      $region25: #{reinforce_attention.1} parent=11 // pred_check
        %p216 = pneg %p124
      $region26: #{reinforce_attention.1} parent=11 // pred_check_branch
        %218 = sbr.rel (%p216) target = $region28
      $region27: #{reinforce_attention.1} parent=11 // pred_region
        _
      $region28: #{reinforce_attention.1} parent=11 // pred_fallthru
        _
      // Predicated region
      $region29: #{reinforce_attention.1} parent=11 // pred_check
        %p219 = pneg %p145
      $region30: #{reinforce_attention.1} parent=11 // pred_check_branch
        %221 = sbr.rel (%p219) target = $region32
      $region31: #{reinforce_attention.1} parent=11 // pred_region
        _
      $region32: #{reinforce_attention.1} parent=11 // pred_fallthru
        _
      // Predicated region
      $region33: #{reinforce_attention.1} parent=11 // pred_check
        %p222 = pneg %p166
      $region34: #{reinforce_attention.1} parent=11 // pred_check_branch
        %224 = sbr.rel (%p222) target = $region36
      $region35: #{reinforce_attention.1} parent=11 // pred_region
        _
      $region36: #{reinforce_attention.1} parent=11 // pred_fallthru
        _
    $region12: #{reinforce_attention.1} parent=5 // pred_fallthru
      _
    %p225 = scmp.lt.s32.totalorder %s14, 2
    // Predicated region
    $region37: #{reinforce_attention.1} parent=5 // pred_check
      %p226 = pneg %p225
    $region38: #{reinforce_attention.1} parent=5 // pred_check_branch
      %228 = sbr.rel (%p226) target = $region40
    $region39: #{reinforce_attention.1} parent=5 // pred_region
      // Predicated region
      $region41: #{reinforce_attention.1} parent=39 // pred_check
        %p229 = pneg %p55
      $region42: #{reinforce_attention.1} parent=39 // pred_check_branch
        %231 = sbr.rel (%p229) target = $region44
      $region43: #{reinforce_attention.1} parent=39 // pred_region
        %p232 = scmp.lt.s32.totalorder %s14, 1
        %s233 = scalar_select %p232, %s14, 1
        %s234 = smul.addr %s233, 2
        %s235 = smul.addr %s234, 4
        %s236 = scalar_lea.vmem %s1, %s235
      $region44: #{reinforce_attention.1} parent=39 // pred_fallthru
        _
    $region40: #{reinforce_attention.1} parent=5 // pred_fallthru
      _
    %p237 = scmp.le.s32.totalorder 1, %s14
    %p238 = scmp.lt.s32.totalorder %s14, 3
    %p239 = pnand %p237, %p238
    %p240 = pneg %p239
    // Predicated region
    $region45: #{reinforce_attention.1} parent=5 // pred_check
      _
    $region46: #{reinforce_attention.1} parent=5 // pred_check_branch
      %242 = sbr.rel (%p239) target = $region48
    $region47: #{reinforce_attention.1} parent=5 // pred_region
      %s243 = ssub.s32 %s14, 1
      %p244 = pneg %p35
      %p245 = pneg %p32
      %p246 = scmp.lt.s32.totalorder %s19, 1
      %s247 = scalar_select %p246, %s19, 1
      %s248 = smul.addr %s247, 2
      %s249 = smul.addr %s248, 4
      %s250 = scalar_lea.vmem %s1, %s249
      %p251 = pneg %p61
      %p252 = pneg %p58
      %p253 = pneg %p82
      %p254 = pneg %p79
      %p255 = pneg %p103
      %p256 = pneg %p100
      %p257 = pneg %p124
      %p258 = pneg %p121
      %p259 = pneg %p145
      %p260 = pneg %p142
      %p261 = pneg %p166
      %p262 = pneg %p163
      %p263 = pneg %p192
      %p264 = pneg %p189
      %p265 = scmp.lt.s32.totalorder %s19, 1
      %s266 = scalar_select %p265, %s19, 1
      %s267 = smul.addr %s266, 2
      %s268 = smul.addr %s267, 4
      %s269 = scalar_lea.vmem %s7, %s268
      %p270 = scmp.lt.s32.totalorder %s19, 1
      %s271 = scalar_select %p270, %s19, 1
      %s272 = smul.addr %s271, 2
      %s273 = smul.addr %s272, 4
      %s274 = scalar_lea.vmem %s1, %s273
      %p275 = scmp.lt.s32.totalorder %s19, 1
      %s276 = scalar_select %p275, %s19, 1
      %s277 = smul.addr %s276, 2
      %s278 = smul.addr %s277, 4
      %s279 = scalar_lea.vmem %s7, %s278
      %v280 = vld [vmem:[%s274] sm:$0xff]
      %v281 = vld [vmem:[%s2] sm:$0xff]
      %v282 = vld [vmem:[%s2 + $0x8] sm:$0xff]
      %v283 = vld [vmem:[%s2 + $0x10] sm:$0xff]
      %v284 = vld [vmem:[%s2 + $0x18] sm:$0xff]
      %v285 = vld [vmem:[%s2 + $0x20] sm:$0xff]
      %v286 = vld [vmem:[%s2 + $0x28] sm:$0xff]
      %v287 = vld [vmem:[%s2 + $0x30] sm:$0xff]
      %v288 = vld [vmem:[%s2 + $0x38] sm:$0xff]
      %v289 = vld [vmem:[%s2 + $0x40] sm:$0xff]
      %v290 = vld [vmem:[%s2 + $0x48] sm:$0xff]
      %v291 = vld [vmem:[%s2 + $0x50] sm:$0xff]
      %v292 = vld [vmem:[%s2 + $0x58] sm:$0xff]
      %v293 = vld [vmem:[%s3] sm:$0xff]
      %v294 = vld [vmem:[%s3 + $0x8] sm:$0xff]
      %v295 = vld [vmem:[%s3 + $0x10] sm:$0xff]
      %v296 = vld [vmem:[%s3 + $0x18] sm:$0xff]
      %v297 = vld [vmem:[%s3 + $0x20] sm:$0xff]
      %v298 = vld [vmem:[%s3 + $0x28] sm:$0xff]
      %v299 = vld [vmem:[%s3 + $0x30] sm:$0xff]
      %v300 = vld [vmem:[%s3 + $0x38] sm:$0xff]
      %v301 = vld [vmem:[%s3 + $0x40] sm:$0xff]
      %v302 = vld [vmem:[%s3 + $0x48] sm:$0xff]
      %v303 = vld [vmem:[%s3 + $0x50] sm:$0xff]
      %v304 = vld [vmem:[%s3 + $0x58] sm:$0xff]
      %306 = vset.pattern.permute.xlu0 0
      %307 = vperm.xlu0 %306, %v293
      %v308 = vpop.permute.xlu0 %307
      %311 = vset.pattern.permute.xlu0 0
      %312 = vperm.xlu0 %311, %v294
      %v313 = vpop.permute.xlu0 %312
      %316 = vset.pattern.permute.xlu0 0
      %317 = vperm.xlu0 %316, %v295
      %v318 = vpop.permute.xlu0 %317
      %321 = vset.pattern.permute.xlu0 0
      %322 = vperm.xlu0 %321, %v296
      %v323 = vpop.permute.xlu0 %322
      %326 = vset.pattern.permute.xlu0 0
      %327 = vperm.xlu0 %326, %v297
      %v328 = vpop.permute.xlu0 %327
      %331 = vset.pattern.permute.xlu0 0
      %332 = vperm.xlu0 %331, %v298
      %v333 = vpop.permute.xlu0 %332
      %336 = vset.pattern.permute.xlu0 0
      %337 = vperm.xlu0 %336, %v299
      %v338 = vpop.permute.xlu0 %337
      %341 = vset.pattern.permute.xlu0 0
      %342 = vperm.xlu0 %341, %v300
      %v343 = vpop.permute.xlu0 %342
      %346 = vset.pattern.permute.xlu0 0
      %347 = vperm.xlu0 %346, %v301
      %v348 = vpop.permute.xlu0 %347
      %351 = vset.pattern.permute.xlu0 0
      %352 = vperm.xlu0 %351, %v302
      %v353 = vpop.permute.xlu0 %352
      %356 = vset.pattern.permute.xlu0 0
      %357 = vperm.xlu0 %356, %v303
      %v358 = vpop.permute.xlu0 %357
      %361 = vset.pattern.permute.xlu0 0
      %362 = vperm.xlu0 %361, %v304
      %v363 = vpop.permute.xlu0 %362
      %v366 = vcombine.high %v280, %v280
      %vm367 = vcmask 31744
      %v369 = vsel %vm367, %v281, 0
      %v372 = vsel %vm367, %v282, 0
      %v375 = vsel %vm367, %v283, 0
      %v378 = vsel %vm367, %v284, 0
      %v381 = vsel %vm367, %v285, 0
      %v384 = vsel %vm367, %v286, 0
      %v387 = vsel %vm367, %v287, 0
      %v390 = vsel %vm367, %v288, 0
      %v393 = vsel %vm367, %v289, 0
      %v396 = vsel %vm367, %v290, 0
      %v399 = vsel %vm367, %v291, 0
      %v402 = vsel %vm367, %v292, 0
      %vm404 = vcmask 1043456
      %v405 = vsel %vm404, %v280, 0
      %v407 = vsel %vm404, %v366, 0
      %409 = vmatprep.subr.mxu0 0.0
      %410 = vmatpush1.msra.mxu0 0.0
      %411 = vmatprep.subr.mxu0 0.0
      %412 = vmatpush1.msra.mxu0 0.0
      %413 = vmatprep.subr.mxu0 0.0
      %414 = vmatpush1.msra.mxu0 0.0
      %415 = vmatprep.subr.mxu0 0.0
      %416 = vmatpush1.msra.mxu0 0.0
      %417 = vmatprep.subr.mxu0 0.0
      %418 = vmatpush1.msra.mxu0 0.0
      %419 = vmatprep.subr.mxu0 0.0
      %420 = vmatpush1.msra.mxu0 0.0
      %421 = vmatprep.subr.mxu0 0.0
      %422 = vmatpush1.msra.mxu0 0.0
      %423 = vmatprep.subr.mxu0 0.0
      %424 = vmatpush1.msra.mxu0 0.0
      %425 = vmatprep.subr.mxu0 0.0
      %426 = vmatpush1.msra.mxu0 0.0
      %427 = vmatprep.subr.mxu0 0.0
      %428 = vmatpush1.msra.mxu0 0.0
      %429 = vmatprep.subr.mxu0 0.0
      %430 = vmatpush1.msra.mxu0 0.0
      %431 = vmatprep.subr.mxu0 0.0
      %432 = vmatpush1.msra.mxu0 0.0
      %433 = vmatprep.subr.mxu0 0.0
      %434 = vmatpush1.msra.mxu0 0.0
      %435 = vmatprep.subr.mxu0 0.0
      %436 = vmatpush1.msra.mxu0 0.0
      %437 = vmatprep.subr.mxu0 0.0
      %438 = vmatpush1.msra.mxu0 0.0
      %439 = vmatprep.subr.mxu0 %v407
      %440 = vmatpush1.msra.mxu0 %v405
      %441 = vmatprep.subr.mxu0 0.0
      %442 = vmatpush2.msra.mxu0 0.0
      %443 = vmatprep.subr.mxu0 0.0
      %444 = vmatpush2.msra.mxu0 0.0
      %445 = vmatprep.subr.mxu0 0.0
      %446 = vmatpush2.msra.mxu0 0.0
      %447 = vmatprep.subr.mxu0 0.0
      %448 = vmatpush2.msra.mxu0 0.0
      %449 = vmatprep.subr.mxu0 0.0
      %450 = vmatpush2.msra.mxu0 0.0
      %451 = vmatprep.subr.mxu0 0.0
      %452 = vmatpush2.msra.mxu0 0.0
      %453 = vmatprep.subr.mxu0 0.0
      %454 = vmatpush2.msra.mxu0 0.0
      %455 = vmatprep.subr.mxu0 0.0
      %456 = vmatpush2.msra.mxu0 0.0
      %457 = vmatprep.subr.mxu0 0.0
      %458 = vmatpush2.msra.mxu0 0.0
      %459 = vmatprep.subr.mxu0 0.0
      %460 = vmatpush2.msra.mxu0 0.0
      %461 = vmatprep.subr.mxu0 0.0
      %462 = vmatpush2.msra.mxu0 0.0
      %463 = vmatprep.subr.mxu0 0.0
      %464 = vmatpush2.msra.mxu0 0.0
      %465 = vmatprep.subr.mxu0 0.0
      %466 = vmatpush2.msra.mxu0 0.0
      %467 = vmatprep.subr.mxu0 0.0
      %468 = vmatpush2.msra.mxu0 0.0
      %469 = vmatprep.subr.mxu0 0.0
      %470 = vmatpush2.msra.mxu0 0.0
      %471 = vmatprep.subr.mxu0 0.0
      %472 = vmatpush2.msra.mxu0 0.0
      %473 = vmatprep.mubr.f32.mxu0 0.0
      %474 = vmatmul.mubr.f32.gmra.mxu0 %v369
      %v475 = vpop.f32.mrf.mxu0
      %v476 = vadd.f32 %v308, %v475
      %v477 = vpop.f32.mrf.mxu0
      %v478 = vadd.f32 %v308, %v477
      %479 = vmatprep.mubr.f32.mxu0 0.0
      %480 = vmatmul.mubr.f32.gmra.mxu0 %v372
      %v481 = vpop.f32.mrf.mxu0
      %v482 = vadd.f32 %v313, %v481
      %v483 = vpop.f32.mrf.mxu0
      %v484 = vadd.f32 %v313, %v483
      %485 = vmatprep.mubr.f32.mxu0 0.0
      %486 = vmatmul.mubr.f32.gmra.mxu0 %v375
      %v487 = vpop.f32.mrf.mxu0
      %v488 = vadd.f32 %v318, %v487
      %v489 = vpop.f32.mrf.mxu0
      %v490 = vadd.f32 %v318, %v489
      %491 = vmatprep.mubr.f32.mxu0 0.0
      %492 = vmatmul.mubr.f32.gmra.mxu0 %v378
      %v493 = vpop.f32.mrf.mxu0
      %v494 = vadd.f32 %v323, %v493
      %v495 = vpop.f32.mrf.mxu0
      %v496 = vadd.f32 %v323, %v495
      %497 = vmatprep.mubr.f32.mxu0 0.0
      %498 = vmatmul.mubr.f32.gmra.mxu0 %v381
      %v499 = vpop.f32.mrf.mxu0
      %v500 = vadd.f32 %v328, %v499
      %v501 = vpop.f32.mrf.mxu0
      %v502 = vadd.f32 %v328, %v501
      %503 = vmatprep.mubr.f32.mxu0 0.0
      %504 = vmatmul.mubr.f32.gmra.mxu0 %v384
      %v505 = vpop.f32.mrf.mxu0
      %v506 = vadd.f32 %v333, %v505
      %v507 = vpop.f32.mrf.mxu0
      %v508 = vadd.f32 %v333, %v507
      %509 = vmatprep.mubr.f32.mxu0 0.0
      %510 = vmatmul.mubr.f32.gmra.mxu0 %v387
      %v511 = vpop.f32.mrf.mxu0
      %v512 = vadd.f32 %v338, %v511
      %v513 = vpop.f32.mrf.mxu0
      %v514 = vadd.f32 %v338, %v513
      %515 = vmatprep.mubr.f32.mxu0 0.0
      %516 = vmatmul.mubr.f32.gmra.mxu0 %v390
      %v517 = vpop.f32.mrf.mxu0
      %v518 = vadd.f32 %v343, %v517
      %v519 = vpop.f32.mrf.mxu0
      %v520 = vadd.f32 %v343, %v519
      %521 = vmatprep.mubr.f32.mxu0 0.0
      %522 = vmatmul.mubr.f32.gmra.mxu0 %v393
      %v523 = vpop.f32.mrf.mxu0
      %v524 = vadd.f32 %v348, %v523
      %v525 = vpop.f32.mrf.mxu0
      %v526 = vadd.f32 %v348, %v525
      %527 = vmatprep.mubr.f32.mxu0 0.0
      %528 = vmatmul.mubr.f32.gmra.mxu0 %v396
      %v529 = vpop.f32.mrf.mxu0
      %v530 = vadd.f32 %v353, %v529
      %v531 = vpop.f32.mrf.mxu0
      %v532 = vadd.f32 %v353, %v531
      %533 = vmatprep.mubr.f32.mxu0 0.0
      %534 = vmatmul.mubr.f32.gmra.mxu0 %v399
      %v535 = vpop.f32.mrf.mxu0
      %v536 = vadd.f32 %v358, %v535
      %v537 = vpop.f32.mrf.mxu0
      %v538 = vadd.f32 %v358, %v537
      %539 = vmatprep.mubr.f32.mxu0 0.0
      %540 = vmatmul.mubr.f32.gmra.mxu0 %v402
      %v541 = vpop.f32.mrf.mxu0
      %v542 = vadd.f32 %v363, %v541
      %v543 = vpop.f32.mrf.mxu0
      %v544 = vadd.f32 %v363, %v543
      %545 = vdwg.mxu0
      %v546 = vmul.f32 %v476, 0.17677669
      %v547 = vmul.f32 %v478, 0.17677669
      %v548 = vmul.f32 %v482, 0.17677669
      %v549 = vmul.f32 %v484, 0.17677669
      %v550 = vmul.f32 %v488, 0.17677669
      %v551 = vmul.f32 %v490, 0.17677669
      %v552 = vmul.f32 %v494, 0.17677669
      %v553 = vmul.f32 %v496, 0.17677669
      %554 = vst [vmem:[#allocation2] sm:$0xff] %v546
      %555 = vst [vmem:[#allocation2 + $0x8] sm:$0xff] %v547
      %556 = vst [vmem:[#allocation2 + $0x10] sm:$0xff] %v548
      %557 = vst [vmem:[#allocation2 + $0x18] sm:$0xff] %v549
      %558 = vst [vmem:[#allocation2 + $0x20] sm:$0xff] %v550
      %559 = vst [vmem:[#allocation2 + $0x28] sm:$0xff] %v551
      %560 = vst [vmem:[#allocation2 + $0x30] sm:$0xff] %v552
      %561 = vst [vmem:[#allocation2 + $0x38] sm:$0xff] %v553
      loop: start=0, step=1, limit=2
      $region49: #{reinforce_attention.1} parent=47 // loop_pre_header
        _
      $region50: #{reinforce_attention.1} parent=47 // loop_header
        %s563 = sphi 0, %s567
        %p564 = scmp.ge.s32.totalorder %s563, 2
      $region51: #{reinforce_attention.1} parent=47 // loop_header_branch
        %566 = sbr.rel (%p564) target = $region55
      $region52: #{reinforce_attention.1} parent=47 // loop_body
        %s568 = smul.u32 %s563, 128
        %s569 = sshra.s32 %s568, 7
        %s570 = sand.u32 %s568, 127
        %s571 = smul.addr %s569, 8
        %s572 = scalar_lea.vmem [#allocation2], %s571
        %v573 = vld [vmem:[%s572] sm:$0xff]
        %v574 = vld [vmem:[%s572 + $0x10] sm:$0xff]
        %v575 = vld [vmem:[%s572 + $0x20] sm:$0xff]
        %v576 = vld [vmem:[%s572 + $0x30] sm:$0xff]
        %577 = vxpose.xlu0.b32.start [1/16] %v573, 128
        %578 = vxpose.xlu0.b32.cont [2/16] %v574, 128
        %579 = vxpose.xlu0.b32.cont [3/16] %v575, 128
        %580 = vxpose.xlu0.b32.cont [4/16] %v576, 128
        %581 = vxpose.xlu0.b32.cont [5/16] 0.0, 128
        %582 = vxpose.xlu0.b32.cont [6/16] 0.0, 128
        %583 = vxpose.xlu0.b32.cont [7/16] 0.0, 128
        %584 = vxpose.xlu0.b32.cont [8/16] 0.0, 128
        %585 = vxpose.xlu0.b32.cont [9/16] 0.0, 128
        %586 = vxpose.xlu0.b32.cont [10/16] 0.0, 128
        %587 = vxpose.xlu0.b32.cont [11/16] 0.0, 128
        %588 = vxpose.xlu0.b32.cont [12/16] 0.0, 128
        %589 = vxpose.xlu0.b32.cont [13/16] 0.0, 128
        %590 = vxpose.xlu0.b32.cont [14/16] 0.0, 128
        %591 = vxpose.xlu0.b32.cont [15/16] 0.0, 128
        %592 = vxpose.xlu0.b32.end [16/16] 0.0, 128
        %v593 = vpop.trf.xlu0
        %v594 = vpop.trf.xlu0
        %v595 = vpop.trf.xlu0
        %v596 = vpop.trf.xlu0
        %v597 = vpop.trf.xlu0
        %v598 = vpop.trf.xlu0
        %v599 = vpop.trf.xlu0
        %v600 = vpop.trf.xlu0
        %v601 = vpop.trf.xlu0
        %v602 = vpop.trf.xlu0
        %v603 = vpop.trf.xlu0
        %v604 = vpop.trf.xlu0
        %v605 = vpop.trf.xlu0
        %v606 = vpop.trf.xlu0
        %v607 = vpop.trf.xlu0
        %v608 = vpop.trf.xlu0
        %vm609 = vcmask 261120
        %v611 = vsel %vm609, %v593, 0
        %v614 = vsel %vm609, %v594, 0
        %v617 = vsel %vm609, %v595, 0
        %v620 = vsel %vm609, %v596, 0
        %v623 = vsel %vm609, %v597, 0
        %v626 = vsel %vm609, %v598, 0
        %v629 = vsel %vm609, %v599, 0
        %v632 = vsel %vm609, %v600, 0
        %v635 = vsel %vm609, %v601, 0
        %v638 = vsel %vm609, %v602, 0
        %v641 = vsel %vm609, %v603, 0
        %v644 = vsel %vm609, %v604, 0
        %v647 = vsel %vm609, %v605, 0
        %v650 = vsel %vm609, %v606, 0
        %v653 = vsel %vm609, %v607, 0
        %v656 = vsel %vm609, %v608, 0
        %658 = vmatprep.subr.mxu0 0.0
        %659 = vmatpush1.msra.mxu0 0.0
        %660 = vmatprep.subr.mxu0 0.0
        %661 = vmatpush1.msra.mxu0 0.0
        %662 = vmatprep.subr.mxu0 0.0
        %663 = vmatpush1.msra.mxu0 0.0
        %664 = vmatprep.subr.mxu0 0.0
        %665 = vmatpush1.msra.mxu0 0.0
        %666 = vmatprep.subr.mxu0 0.0
        %667 = vmatpush1.msra.mxu0 0.0
        %668 = vmatprep.subr.mxu0 0.0
        %669 = vmatpush1.msra.mxu0 0.0
        %670 = vmatprep.subr.mxu0 0.0
        %671 = vmatpush1.msra.mxu0 0.0
        %672 = vmatprep.subr.mxu0 0.0
        %673 = vmatpush1.msra.mxu0 0.0
        %674 = vmatprep.subr.mxu0 0.0
        %675 = vmatpush1.msra.mxu0 0.0
        %676 = vmatprep.subr.mxu0 0.0
        %677 = vmatpush1.msra.mxu0 0.0
        %678 = vmatprep.subr.mxu0 0.0
        %679 = vmatpush1.msra.mxu0 0.0
        %680 = vmatprep.subr.mxu0 0.0
        %681 = vmatpush1.msra.mxu0 0.0
        %682 = vmatprep.subr.mxu0 %v520
        %683 = vmatpush1.msra.mxu0 %v518
        %684 = vmatprep.subr.mxu0 %v514
        %685 = vmatpush1.msra.mxu0 %v512
        %686 = vmatprep.subr.mxu0 %v508
        %687 = vmatpush1.msra.mxu0 %v506
        %688 = vmatprep.subr.mxu0 %v502
        %689 = vmatpush1.msra.mxu0 %v500
        %690 = vmatprep.subr.mxu0 0.0
        %691 = vmatpush2.msra.mxu0 0.0
        %692 = vmatprep.subr.mxu0 0.0
        %693 = vmatpush2.msra.mxu0 0.0
        %694 = vmatprep.subr.mxu0 0.0
        %695 = vmatpush2.msra.mxu0 0.0
        %696 = vmatprep.subr.mxu0 0.0
        %697 = vmatpush2.msra.mxu0 0.0
        %698 = vmatprep.subr.mxu0 0.0
        %699 = vmatpush2.msra.mxu0 0.0
        %700 = vmatprep.subr.mxu0 0.0
        %701 = vmatpush2.msra.mxu0 0.0
        %702 = vmatprep.subr.mxu0 0.0
        %703 = vmatpush2.msra.mxu0 0.0
        %704 = vmatprep.subr.mxu0 0.0
        %705 = vmatpush2.msra.mxu0 0.0
        %706 = vmatprep.subr.mxu0 0.0
        %707 = vmatpush2.msra.mxu0 0.0
        %708 = vmatprep.subr.mxu0 0.0
        %709 = vmatpush2.msra.mxu0 0.0
        %710 = vmatprep.subr.mxu0 0.0
        %711 = vmatpush2.msra.mxu0 0.0
        %712 = vmatprep.subr.mxu0 0.0
        %713 = vmatpush2.msra.mxu0 0.0
        %714 = vmatprep.subr.mxu0 0.0
        %715 = vmatpush2.msra.mxu0 0.0
        %716 = vmatprep.subr.mxu0 0.0
        %717 = vmatpush2.msra.mxu0 0.0
        %718 = vmatprep.subr.mxu0 0.0
        %719 = vmatpush2.msra.mxu0 0.0
        %720 = vmatprep.subr.mxu0 0.0
        %721 = vmatpush2.msra.mxu0 0.0
        %722 = vmatprep.mubr.f32.mxu0 0.0
        %723 = vmatmul.mubr.f32.gmra.mxu0 %v611
        %v724 = vpop.f32.mrf.mxu0
        %v725 = vadd.f32 0.0, %v724
        %v726 = vpop.f32.mrf.mxu0
        %v727 = vadd.f32 0.0, %v726
        %728 = vmatprep.mubr.f32.mxu0 0.0
        %729 = vmatmul.mubr.f32.gmra.mxu0 %v614
        %v730 = vpop.f32.mrf.mxu0
        %v731 = vadd.f32 0.0, %v730
        %v732 = vpop.f32.mrf.mxu0
        %v733 = vadd.f32 0.0, %v732
        %734 = vmatprep.mubr.f32.mxu0 0.0
        %735 = vmatmul.mubr.f32.gmra.mxu0 %v617
        %v736 = vpop.f32.mrf.mxu0
        %v737 = vadd.f32 0.0, %v736
        %v738 = vpop.f32.mrf.mxu0
        %v739 = vadd.f32 0.0, %v738
        %740 = vmatprep.mubr.f32.mxu0 0.0
        %741 = vmatmul.mubr.f32.gmra.mxu0 %v620
        %v742 = vpop.f32.mrf.mxu0
        %v743 = vadd.f32 0.0, %v742
        %v744 = vpop.f32.mrf.mxu0
        %v745 = vadd.f32 0.0, %v744
        %746 = vmatprep.mubr.f32.mxu0 0.0
        %747 = vmatmul.mubr.f32.gmra.mxu0 %v623
        %v748 = vpop.f32.mrf.mxu0
        %v749 = vadd.f32 0.0, %v748
        %v750 = vpop.f32.mrf.mxu0
        %v751 = vadd.f32 0.0, %v750
        %752 = vmatprep.mubr.f32.mxu0 0.0
        %753 = vmatmul.mubr.f32.gmra.mxu0 %v626
        %v754 = vpop.f32.mrf.mxu0
        %v755 = vadd.f32 0.0, %v754
        %v756 = vpop.f32.mrf.mxu0
        %v757 = vadd.f32 0.0, %v756
        %758 = vmatprep.mubr.f32.mxu0 0.0
        %759 = vmatmul.mubr.f32.gmra.mxu0 %v629
        %v760 = vpop.f32.mrf.mxu0
        %v761 = vadd.f32 0.0, %v760
        %v762 = vpop.f32.mrf.mxu0
        %v763 = vadd.f32 0.0, %v762
        %764 = vmatprep.mubr.f32.mxu0 0.0
        %765 = vmatmul.mubr.f32.gmra.mxu0 %v632
        %v766 = vpop.f32.mrf.mxu0
        %v767 = vadd.f32 0.0, %v766
        %v768 = vpop.f32.mrf.mxu0
        %v769 = vadd.f32 0.0, %v768
        %770 = vmatprep.mubr.f32.mxu0 0.0
        %771 = vmatmul.mubr.f32.gmra.mxu0 %v635
        %v772 = vpop.f32.mrf.mxu0
        %v773 = vadd.f32 0.0, %v772
        %v774 = vpop.f32.mrf.mxu0
        %v775 = vadd.f32 0.0, %v774
        %776 = vmatprep.mubr.f32.mxu0 0.0
        %777 = vmatmul.mubr.f32.gmra.mxu0 %v638
        %v778 = vpop.f32.mrf.mxu0
        %v779 = vadd.f32 0.0, %v778
        %v780 = vpop.f32.mrf.mxu0
        %v781 = vadd.f32 0.0, %v780
        %782 = vmatprep.mubr.f32.mxu0 0.0
        %783 = vmatmul.mubr.f32.gmra.mxu0 %v641
        %v784 = vpop.f32.mrf.mxu0
        %v785 = vadd.f32 0.0, %v784
        %v786 = vpop.f32.mrf.mxu0
        %v787 = vadd.f32 0.0, %v786
        %788 = vmatprep.mubr.f32.mxu0 0.0
        %789 = vmatmul.mubr.f32.gmra.mxu0 %v644
        %v790 = vpop.f32.mrf.mxu0
        %v791 = vadd.f32 0.0, %v790
        %v792 = vpop.f32.mrf.mxu0
        %v793 = vadd.f32 0.0, %v792
        %794 = vmatprep.mubr.f32.mxu0 0.0
        %795 = vmatmul.mubr.f32.gmra.mxu0 %v647
        %v796 = vpop.f32.mrf.mxu0
        %v797 = vadd.f32 0.0, %v796
        %v798 = vpop.f32.mrf.mxu0
        %v799 = vadd.f32 0.0, %v798
        %800 = vmatprep.mubr.f32.mxu0 0.0
        %801 = vmatmul.mubr.f32.gmra.mxu0 %v650
        %v802 = vpop.f32.mrf.mxu0
        %v803 = vadd.f32 0.0, %v802
        %v804 = vpop.f32.mrf.mxu0
        %v805 = vadd.f32 0.0, %v804
        %806 = vmatprep.mubr.f32.mxu0 0.0
        %807 = vmatmul.mubr.f32.gmra.mxu0 %v653
        %v808 = vpop.f32.mrf.mxu0
        %v809 = vadd.f32 0.0, %v808
        %v810 = vpop.f32.mrf.mxu0
        %v811 = vadd.f32 0.0, %v810
        %812 = vmatprep.mubr.f32.mxu0 0.0
        %813 = vmatmul.mubr.f32.gmra.mxu0 %v656
        %v814 = vpop.f32.mrf.mxu0
        %v815 = vadd.f32 0.0, %v814
        %v816 = vpop.f32.mrf.mxu0
        %v817 = vadd.f32 0.0, %v816
        %818 = vdwg.mxu0
        %v819 = vmax.f32 %v725, %v727
        %820 = vmax.xlane.f32.xlu0 %v819
        %v821 = vpop.xlane.xlu0 %820
        %v822 = vmax.f32 %v731, %v733
        %823 = vmax.xlane.f32.xlu0 %v822
        %v824 = vpop.xlane.xlu0 %823
        %v825 = vmax.f32 %v737, %v739
        %826 = vmax.xlane.f32.xlu0 %v825
        %v827 = vpop.xlane.xlu0 %826
        %v828 = vmax.f32 %v743, %v745
        %829 = vmax.xlane.f32.xlu0 %v828
        %v830 = vpop.xlane.xlu0 %829
        %v831 = vmax.f32 %v749, %v751
        %832 = vmax.xlane.f32.xlu0 %v831
        %v833 = vpop.xlane.xlu0 %832
        %v834 = vmax.f32 %v755, %v757
        %835 = vmax.xlane.f32.xlu0 %v834
        %v836 = vpop.xlane.xlu0 %835
        %v837 = vmax.f32 %v761, %v763
        %838 = vmax.xlane.f32.xlu0 %v837
        %v839 = vpop.xlane.xlu0 %838
        %v840 = vmax.f32 %v767, %v769
        %841 = vmax.xlane.f32.xlu0 %v840
        %v842 = vpop.xlane.xlu0 %841
        %v843 = vmax.f32 %v773, %v775
        %844 = vmax.xlane.f32.xlu0 %v843
        %v845 = vpop.xlane.xlu0 %844
        %v846 = vmax.f32 %v779, %v781
        %847 = vmax.xlane.f32.xlu0 %v846
        %v848 = vpop.xlane.xlu0 %847
        %v849 = vmax.f32 %v785, %v787
        %850 = vmax.xlane.f32.xlu0 %v849
        %v851 = vpop.xlane.xlu0 %850
        %v852 = vmax.f32 %v791, %v793
        %853 = vmax.xlane.f32.xlu0 %v852
        %v854 = vpop.xlane.xlu0 %853
        %v855 = vmax.f32 %v797, %v799
        %856 = vmax.xlane.f32.xlu0 %v855
        %v857 = vpop.xlane.xlu0 %856
        %v858 = vmax.f32 %v803, %v805
        %859 = vmax.xlane.f32.xlu0 %v858
        %v860 = vpop.xlane.xlu0 %859
        %v861 = vmax.f32 %v809, %v811
        %862 = vmax.xlane.f32.xlu0 %v861
        %v863 = vpop.xlane.xlu0 %862
        %v864 = vmax.f32 %v815, %v817
        %865 = vmax.xlane.f32.xlu0 %v864
        %v866 = vpop.xlane.xlu0 %865
        %v867 = vsub.f32 %v725, %v821
        %v868 = vsub.f32 %v727, %v821
        %v869 = vsub.f32 %v731, %v824
        %v870 = vsub.f32 %v733, %v824
        %v871 = vsub.f32 %v737, %v827
        %v872 = vsub.f32 %v739, %v827
        %v873 = vsub.f32 %v743, %v830
        %v874 = vsub.f32 %v745, %v830
        %v875 = vsub.f32 %v749, %v833
        %v876 = vsub.f32 %v751, %v833
        %v877 = vsub.f32 %v755, %v836
        %v878 = vsub.f32 %v757, %v836
        %v879 = vsub.f32 %v761, %v839
        %v880 = vsub.f32 %v763, %v839
        %v881 = vsub.f32 %v767, %v842
        %v882 = vsub.f32 %v769, %v842
        %v883 = vsub.f32 %v773, %v845
        %v884 = vsub.f32 %v775, %v845
        %v885 = vsub.f32 %v779, %v848
        %v886 = vsub.f32 %v781, %v848
        %v887 = vsub.f32 %v785, %v851
        %v888 = vsub.f32 %v787, %v851
        %v889 = vsub.f32 %v791, %v854
        %v890 = vsub.f32 %v793, %v854
        %v891 = vsub.f32 %v797, %v857
        %v892 = vsub.f32 %v799, %v857
        %v893 = vsub.f32 %v803, %v860
        %v894 = vsub.f32 %v805, %v860
        %v895 = vsub.f32 %v809, %v863
        %v896 = vsub.f32 %v811, %v863
        %v897 = vsub.f32 %v815, %v866
        %v898 = vsub.f32 %v817, %v866
        %v899 = vmul.f32 %v867, 1.442695
        %v900 = vpow.pop %v899
        %v901 = vmul.f32 %v868, 1.442695
        %v902 = vpow.pop %v901
        %v903 = vmul.f32 %v869, 1.442695
        %v904 = vpow.pop %v903
        %v905 = vmul.f32 %v870, 1.442695
        %v906 = vpow.pop %v905
        %v907 = vmul.f32 %v871, 1.442695
        %v908 = vpow.pop %v907
        %v909 = vmul.f32 %v872, 1.442695
        %v910 = vpow.pop %v909
        %v911 = vmul.f32 %v873, 1.442695
        %v912 = vpow.pop %v911
        %v913 = vmul.f32 %v874, 1.442695
        %v914 = vpow.pop %v913
        %v915 = vmul.f32 %v875, 1.442695
        %v916 = vpow.pop %v915
        %v917 = vmul.f32 %v876, 1.442695
        %v918 = vpow.pop %v917
        %v919 = vmul.f32 %v877, 1.442695
        %v920 = vpow.pop %v919
        %v921 = vmul.f32 %v878, 1.442695
        %v922 = vpow.pop %v921
        %v923 = vmul.f32 %v879, 1.442695
        %v924 = vpow.pop %v923
        %v925 = vmul.f32 %v880, 1.442695
        %v926 = vpow.pop %v925
        %v927 = vmul.f32 %v881, 1.442695
        %v928 = vpow.pop %v927
        %v929 = vmul.f32 %v882, 1.442695
        %v930 = vpow.pop %v929
        %v931 = vmul.f32 %v883, 1.442695
        %v932 = vpow.pop %v931
        %v933 = vmul.f32 %v884, 1.442695
        %v934 = vpow.pop %v933
        %v935 = vmul.f32 %v885, 1.442695
        %v936 = vpow.pop %v935
        %v937 = vmul.f32 %v886, 1.442695
        %v938 = vpow.pop %v937
        %v939 = vmul.f32 %v887, 1.442695
        %v940 = vpow.pop %v939
        %v941 = vmul.f32 %v888, 1.442695
        %v942 = vpow.pop %v941
        %v943 = vmul.f32 %v889, 1.442695
        %v944 = vpow.pop %v943
        %v945 = vmul.f32 %v890, 1.442695
        %v946 = vpow.pop %v945
        %v947 = vmul.f32 %v891, 1.442695
        %v948 = vpow.pop %v947
        %v949 = vmul.f32 %v892, 1.442695
        %v950 = vpow.pop %v949
        %v951 = vmul.f32 %v893, 1.442695
        %v952 = vpow.pop %v951
        %v953 = vmul.f32 %v894, 1.442695
        %v954 = vpow.pop %v953
        %v955 = vmul.f32 %v895, 1.442695
        %v956 = vpow.pop %v955
        %v957 = vmul.f32 %v896, 1.442695
        %v958 = vpow.pop %v957
        %v959 = vmul.f32 %v897, 1.442695
        %v960 = vpow.pop %v959
        %v961 = vmul.f32 %v898, 1.442695
        %v962 = vpow.pop %v961
        %v963 = vadd.f32 %v900, %v902
        %964 = vadd.xlane.f32.xlu0 %v963
        %v965 = vpop.xlane.xlu0 %964
        %v966 = vadd.f32 %v904, %v906
        %967 = vadd.xlane.f32.xlu0 %v966
        %v968 = vpop.xlane.xlu0 %967
        %v969 = vadd.f32 %v908, %v910
        %970 = vadd.xlane.f32.xlu0 %v969
        %v971 = vpop.xlane.xlu0 %970
        %v972 = vadd.f32 %v912, %v914
        %973 = vadd.xlane.f32.xlu0 %v972
        %v974 = vpop.xlane.xlu0 %973
        %v975 = vadd.f32 %v916, %v918
        %976 = vadd.xlane.f32.xlu0 %v975
        %v977 = vpop.xlane.xlu0 %976
        %v978 = vadd.f32 %v920, %v922
        %979 = vadd.xlane.f32.xlu0 %v978
        %v980 = vpop.xlane.xlu0 %979
        %v981 = vadd.f32 %v924, %v926
        %982 = vadd.xlane.f32.xlu0 %v981
        %v983 = vpop.xlane.xlu0 %982
        %v984 = vadd.f32 %v928, %v930
        %985 = vadd.xlane.f32.xlu0 %v984
        %v986 = vpop.xlane.xlu0 %985
        %v987 = vadd.f32 %v932, %v934
        %988 = vadd.xlane.f32.xlu0 %v987
        %v989 = vpop.xlane.xlu0 %988
        %v990 = vadd.f32 %v936, %v938
        %991 = vadd.xlane.f32.xlu0 %v990
        %v992 = vpop.xlane.xlu0 %991
        %v993 = vadd.f32 %v940, %v942
        %994 = vadd.xlane.f32.xlu0 %v993
        %v995 = vpop.xlane.xlu0 %994
        %v996 = vadd.f32 %v944, %v946
        %997 = vadd.xlane.f32.xlu0 %v996
        %v998 = vpop.xlane.xlu0 %997
        %v999 = vadd.f32 %v948, %v950
        %1000 = vadd.xlane.f32.xlu0 %v999
        %v1001 = vpop.xlane.xlu0 %1000
        %v1002 = vadd.f32 %v952, %v954
        %1003 = vadd.xlane.f32.xlu0 %v1002
        %v1004 = vpop.xlane.xlu0 %1003
        %v1005 = vadd.f32 %v956, %v958
        %1006 = vadd.xlane.f32.xlu0 %v1005
        %v1007 = vpop.xlane.xlu0 %1006
        %v1008 = vadd.f32 %v960, %v962
        %1009 = vadd.xlane.f32.xlu0 %v1008
        %v1010 = vpop.xlane.xlu0 %1009
        %v1011 = vrcp.pop %v965
        %v1012 = vrcp.pop %v968
        %v1013 = vrcp.pop %v971
        %v1014 = vrcp.pop %v974
        %v1015 = vrcp.pop %v977
        %v1016 = vrcp.pop %v980
        %v1017 = vrcp.pop %v983
        %v1018 = vrcp.pop %v986
        %v1019 = vrcp.pop %v989
        %v1020 = vrcp.pop %v992
        %v1021 = vrcp.pop %v995
        %v1022 = vrcp.pop %v998
        %v1023 = vrcp.pop %v1001
        %v1024 = vrcp.pop %v1004
        %v1025 = vrcp.pop %v1007
        %v1026 = vrcp.pop %v1010
        %v1027 = vmul.f32 %v965, %v1011
        %v1028 = vmul.f32 %v968, %v1012
        %v1029 = vmul.f32 %v971, %v1013
        %v1030 = vmul.f32 %v974, %v1014
        %v1031 = vmul.f32 %v977, %v1015
        %v1032 = vmul.f32 %v980, %v1016
        %v1033 = vmul.f32 %v983, %v1017
        %v1034 = vmul.f32 %v986, %v1018
        %v1035 = vmul.f32 %v989, %v1019
        %v1036 = vmul.f32 %v992, %v1020
        %v1037 = vmul.f32 %v995, %v1021
        %v1038 = vmul.f32 %v998, %v1022
        %v1039 = vmul.f32 %v1001, %v1023
        %v1040 = vmul.f32 %v1004, %v1024
        %v1041 = vmul.f32 %v1007, %v1025
        %v1042 = vmul.f32 %v1010, %v1026
        %v1043 = vsub.f32 2.0, %v1027
        %v1044 = vsub.f32 2.0, %v1028
        %v1045 = vsub.f32 2.0, %v1029
        %v1046 = vsub.f32 2.0, %v1030
        %v1047 = vsub.f32 2.0, %v1031
        %v1048 = vsub.f32 2.0, %v1032
        %v1049 = vsub.f32 2.0, %v1033
        %v1050 = vsub.f32 2.0, %v1034
        %v1051 = vsub.f32 2.0, %v1035
        %v1052 = vsub.f32 2.0, %v1036
        %v1053 = vsub.f32 2.0, %v1037
        %v1054 = vsub.f32 2.0, %v1038
        %v1055 = vsub.f32 2.0, %v1039
        %v1056 = vsub.f32 2.0, %v1040
        %v1057 = vsub.f32 2.0, %v1041
        %v1058 = vsub.f32 2.0, %v1042
        %v1059 = vmul.f32 %v1011, %v1043
        %v1060 = vmul.f32 %v1012, %v1044
        %v1061 = vmul.f32 %v1013, %v1045
        %v1062 = vmul.f32 %v1014, %v1046
        %v1063 = vmul.f32 %v1015, %v1047
        %v1064 = vmul.f32 %v1016, %v1048
        %v1065 = vmul.f32 %v1017, %v1049
        %v1066 = vmul.f32 %v1018, %v1050
        %v1067 = vmul.f32 %v1019, %v1051
        %v1068 = vmul.f32 %v1020, %v1052
        %v1069 = vmul.f32 %v1021, %v1053
        %v1070 = vmul.f32 %v1022, %v1054
        %v1071 = vmul.f32 %v1023, %v1055
        %v1072 = vmul.f32 %v1024, %v1056
        %v1073 = vmul.f32 %v1025, %v1057
        %v1074 = vmul.f32 %v1026, %v1058
        %v1075 = vmul.f32 %v900, %v1059
        %v1076 = vmul.f32 %v902, %v1059
        %v1077 = vmul.f32 %v904, %v1060
        %v1078 = vmul.f32 %v906, %v1060
        %v1079 = vmul.f32 %v908, %v1061
        %v1080 = vmul.f32 %v910, %v1061
        %v1081 = vmul.f32 %v912, %v1062
        %v1082 = vmul.f32 %v914, %v1062
        %v1083 = vmul.f32 %v916, %v1063
        %v1084 = vmul.f32 %v918, %v1063
        %v1085 = vmul.f32 %v920, %v1064
        %v1086 = vmul.f32 %v922, %v1064
        %v1087 = vmul.f32 %v924, %v1065
        %v1088 = vmul.f32 %v926, %v1065
        %v1089 = vmul.f32 %v928, %v1066
        %v1090 = vmul.f32 %v930, %v1066
        %v1091 = vmul.f32 %v932, %v1067
        %v1092 = vmul.f32 %v934, %v1067
        %v1093 = vmul.f32 %v936, %v1068
        %v1094 = vmul.f32 %v938, %v1068
        %v1095 = vmul.f32 %v940, %v1069
        %v1096 = vmul.f32 %v942, %v1069
        %v1097 = vmul.f32 %v944, %v1070
        %v1098 = vmul.f32 %v946, %v1070
        %v1099 = vmul.f32 %v948, %v1071
        %v1100 = vmul.f32 %v950, %v1071
        %v1101 = vmul.f32 %v952, %v1072
        %v1102 = vmul.f32 %v954, %v1072
        %v1103 = vmul.f32 %v956, %v1073
        %v1104 = vmul.f32 %v958, %v1073
        %v1105 = vmul.f32 %v960, %v1074
        %v1106 = vmul.f32 %v962, %v1074
        %1107 = vmatprep.subr.mxu0 %v1106
        %1108 = vmatpush1.xpose.msra.mxu0 %v1105
        %1109 = vmatprep.subr.mxu0 %v1104
        %1110 = vmatpush1.xpose.msra.mxu0 %v1103
        %1111 = vmatprep.subr.mxu0 %v1102
        %1112 = vmatpush1.xpose.msra.mxu0 %v1101
        %1113 = vmatprep.subr.mxu0 %v1100
        %1114 = vmatpush1.xpose.msra.mxu0 %v1099
        %1115 = vmatprep.subr.mxu0 %v1098
        %1116 = vmatpush1.xpose.msra.mxu0 %v1097
        %1117 = vmatprep.subr.mxu0 %v1096
        %1118 = vmatpush1.xpose.msra.mxu0 %v1095
        %1119 = vmatprep.subr.mxu0 %v1094
        %1120 = vmatpush1.xpose.msra.mxu0 %v1093
        %1121 = vmatprep.subr.mxu0 %v1092
        %1122 = vmatpush1.xpose.msra.mxu0 %v1091
        %1123 = vmatprep.subr.mxu0 %v1090
        %1124 = vmatpush1.xpose.msra.mxu0 %v1089
        %1125 = vmatprep.subr.mxu0 %v1088
        %1126 = vmatpush1.xpose.msra.mxu0 %v1087
        %1127 = vmatprep.subr.mxu0 %v1086
        %1128 = vmatpush1.xpose.msra.mxu0 %v1085
        %1129 = vmatprep.subr.mxu0 %v1084
        %1130 = vmatpush1.xpose.msra.mxu0 %v1083
        %1131 = vmatprep.subr.mxu0 %v1082
        %1132 = vmatpush1.xpose.msra.mxu0 %v1081
        %1133 = vmatprep.subr.mxu0 %v1080
        %1134 = vmatpush1.xpose.msra.mxu0 %v1079
        %1135 = vmatprep.subr.mxu0 %v1078
        %1136 = vmatpush1.xpose.msra.mxu0 %v1077
        %1137 = vmatprep.subr.mxu0 %v1076
        %1138 = vmatpush1.xpose.msra.mxu0 %v1075
        %1139 = vmatprep.subr.mxu0 0.0
        %1140 = vmatpush2.xpose.msra.mxu0 0.0
        %1141 = vmatprep.subr.mxu0 0.0
        %1142 = vmatpush2.xpose.msra.mxu0 0.0
        %1143 = vmatprep.subr.mxu0 0.0
        %1144 = vmatpush2.xpose.msra.mxu0 0.0
        %1145 = vmatprep.subr.mxu0 0.0
        %1146 = vmatpush2.xpose.msra.mxu0 0.0
        %1147 = vmatprep.subr.mxu0 0.0
        %1148 = vmatpush2.xpose.msra.mxu0 0.0
        %1149 = vmatprep.subr.mxu0 0.0
        %1150 = vmatpush2.xpose.msra.mxu0 0.0
        %1151 = vmatprep.subr.mxu0 0.0
        %1152 = vmatpush2.xpose.msra.mxu0 0.0
        %1153 = vmatprep.subr.mxu0 0.0
        %1154 = vmatpush2.xpose.msra.mxu0 0.0
        %1155 = vmatprep.subr.mxu0 0.0
        %1156 = vmatpush2.xpose.msra.mxu0 0.0
        %1157 = vmatprep.subr.mxu0 0.0
        %1158 = vmatpush2.xpose.msra.mxu0 0.0
        %1159 = vmatprep.subr.mxu0 0.0
        %1160 = vmatpush2.xpose.msra.mxu0 0.0
        %1161 = vmatprep.subr.mxu0 0.0
        %1162 = vmatpush2.xpose.msra.mxu0 0.0
        %1163 = vmatprep.subr.mxu0 0.0
        %1164 = vmatpush2.xpose.msra.mxu0 0.0
        %1165 = vmatprep.subr.mxu0 0.0
        %1166 = vmatpush2.xpose.msra.mxu0 0.0
        %1167 = vmatprep.subr.mxu0 0.0
        %1168 = vmatpush2.xpose.msra.mxu0 0.0
        %1169 = vmatprep.subr.mxu0 0.0
        %1170 = vmatpush2.xpose.msra.mxu0 0.0
        %1171 = vmatprep.mubr.f32.mxu0 %v526
        %1172 = vmatmul.mubr.f32.gmra.mxu0 %v524
        %v1173 = vpop.f32.mrf.mxu0
        %v1174 = vadd.f32 0.0, %v1173
        %v1175 = vpop.f32.mrf.mxu0
        %1176 = vmatprep.mubr.f32.mxu0 %v532
        %1177 = vmatmul.mubr.f32.gmra.mxu0 %v530
        %v1178 = vpop.f32.mrf.mxu0
        %v1179 = vadd.f32 0.0, %v1178
        %v1180 = vpop.f32.mrf.mxu0
        %1181 = vmatprep.mubr.f32.mxu0 %v538
        %1182 = vmatmul.mubr.f32.gmra.mxu0 %v536
        %v1183 = vpop.f32.mrf.mxu0
        %v1184 = vadd.f32 0.0, %v1183
        %v1185 = vpop.f32.mrf.mxu0
        %1186 = vmatprep.mubr.f32.mxu0 %v544
        %1187 = vmatmul.mubr.f32.gmra.mxu0 %v542
        %v1188 = vpop.f32.mrf.mxu0
        %v1189 = vadd.f32 0.0, %v1188
        %v1190 = vpop.f32.mrf.mxu0
        %1191 = vdwg.mxu0
        %s1192 = smul.addr %s569, 8
        %s1193 = scalar_lea.vmem [#allocation3], %s1192
        %1194 = vst [vmem:[%s1193] sm:$0xff] %v1174
        %1195 = vst [vmem:[%s1193 + $0x10] sm:$0xff] %v1179
        %1196 = vst [vmem:[%s1193 + $0x20] sm:$0xff] %v1184
        %1197 = vst [vmem:[%s1193 + $0x30] sm:$0xff] %v1189
      $region53: #{reinforce_attention.1} parent=47 // loop_footer
        %s567 = sadd.s32 1, %s563
      $region54: #{reinforce_attention.1} parent=47 // loop_footer_branch
        %562 = sbr.rel target = $region50
      $region55: #{reinforce_attention.1} parent=47 // loop_exit
        _
      %v1198 = vld [vmem:[%s4] sm:$0xf]
      %v1199 = vld [vmem:[#allocation3] sm:$0xff]
      %v1200 = vld [vmem:[#allocation3 + $0x8] sm:$0xff]
      %v1201 = vld [vmem:[#allocation3 + $0x10] sm:$0xff]
      %v1202 = vld [vmem:[#allocation3 + $0x18] sm:$0xff]
      %v1203 = vld [vmem:[#allocation3 + $0x20] sm:$0xff]
      %v1204 = vld [vmem:[#allocation3 + $0x28] sm:$0xff]
      %v1205 = vld [vmem:[#allocation3 + $0x30] sm:$0xff]
      %v1206 = vld [vmem:[#allocation3 + $0x38] sm:$0xff]
      %v1207 = vld [vmem:[%s5] sm:$0xf]
      %1209 = vset.pattern.permute.xlu0 0
      %1210 = vperm.xlu0 %1209, %v1207
      %v1211 = vpop.permute.xlu0 %1210
      %vm1213 = vcmask 261120
      %v1215 = vsel %vm1213, %v1198, 0
      %1217 = vmatprep.subr.mxu0 0.0
      %1218 = vmatpush1.msra.mxu0 0.0
      %1219 = vmatprep.subr.mxu0 0.0
      %1220 = vmatpush1.msra.mxu0 0.0
      %1221 = vmatprep.subr.mxu0 0.0
      %1222 = vmatpush1.msra.mxu0 0.0
      %1223 = vmatprep.subr.mxu0 0.0
      %1224 = vmatpush1.msra.mxu0 0.0
      %1225 = vmatprep.subr.mxu0 0.0
      %1226 = vmatpush1.msra.mxu0 0.0
      %1227 = vmatprep.subr.mxu0 0.0
      %1228 = vmatpush1.msra.mxu0 0.0
      %1229 = vmatprep.subr.mxu0 0.0
      %1230 = vmatpush1.msra.mxu0 0.0
      %1231 = vmatprep.subr.mxu0 0.0
      %1232 = vmatpush1.msra.mxu0 0.0
      %1233 = vmatprep.subr.mxu0 0.0
      %1234 = vmatpush1.msra.mxu0 0.0
      %1235 = vmatprep.subr.mxu0 0.0
      %1236 = vmatpush1.msra.mxu0 0.0
      %1237 = vmatprep.subr.mxu0 0.0
      %1238 = vmatpush1.msra.mxu0 0.0
      %1239 = vmatprep.subr.mxu0 0.0
      %1240 = vmatpush1.msra.mxu0 0.0
      %1241 = vmatprep.subr.mxu0 %v1206
      %1242 = vmatpush1.msra.mxu0 %v1205
      %1243 = vmatprep.subr.mxu0 %v1204
      %1244 = vmatpush1.msra.mxu0 %v1203
      %1245 = vmatprep.subr.mxu0 %v1202
      %1246 = vmatpush1.msra.mxu0 %v1201
      %1247 = vmatprep.subr.mxu0 %v1200
      %1248 = vmatpush1.msra.mxu0 %v1199
      %1249 = vmatprep.subr.mxu0 0.0
      %1250 = vmatpush2.msra.mxu0 0.0
      %1251 = vmatprep.subr.mxu0 0.0
      %1252 = vmatpush2.msra.mxu0 0.0
      %1253 = vmatprep.subr.mxu0 0.0
      %1254 = vmatpush2.msra.mxu0 0.0
      %1255 = vmatprep.subr.mxu0 0.0
      %1256 = vmatpush2.msra.mxu0 0.0
      %1257 = vmatprep.subr.mxu0 0.0
      %1258 = vmatpush2.msra.mxu0 0.0
      %1259 = vmatprep.subr.mxu0 0.0
      %1260 = vmatpush2.msra.mxu0 0.0
      %1261 = vmatprep.subr.mxu0 0.0
      %1262 = vmatpush2.msra.mxu0 0.0
      %1263 = vmatprep.subr.mxu0 0.0
      %1264 = vmatpush2.msra.mxu0 0.0
      %1265 = vmatprep.subr.mxu0 0.0
      %1266 = vmatpush2.msra.mxu0 0.0
      %1267 = vmatprep.subr.mxu0 0.0
      %1268 = vmatpush2.msra.mxu0 0.0
      %1269 = vmatprep.subr.mxu0 0.0
      %1270 = vmatpush2.msra.mxu0 0.0
      %1271 = vmatprep.subr.mxu0 0.0
      %1272 = vmatpush2.msra.mxu0 0.0
      %1273 = vmatprep.subr.mxu0 0.0
      %1274 = vmatpush2.msra.mxu0 0.0
      %1275 = vmatprep.subr.mxu0 0.0
      %1276 = vmatpush2.msra.mxu0 0.0
      %1277 = vmatprep.subr.mxu0 0.0
      %1278 = vmatpush2.msra.mxu0 0.0
      %1279 = vmatprep.subr.mxu0 0.0
      %1280 = vmatpush2.msra.mxu0 0.0
      %1281 = vmatprep.mubr.f32.mxu0 0.0
      %1282 = vmatmul.mubr.f32.gmra.mxu0 %v1215
      %v1283 = vpop.f32.mrf.mxu0
      %v1284 = vadd.f32 %v1211, %v1283
      %v1285 = vpop.f32.mrf.mxu0
      %v1286 = vadd.f32 %v1211, %v1285
      %1287 = vdwg.mxu0
      %s1288 = sld [smem:[#allocation4]]
      %v1289 = vstv %s1288
      %v1290 = vmul.f32 %v1289, %v1284
      %v1291 = vmul.f32 %v1289, %v1286
      %s1292 = ssub.f32 1.0, %s1288
      %v1293 = vstv %s1292
      %v1294 = vmul.f32 %v1293, %v280
      %v1296 = vcombine.high %v1294, %v1294
      %v1298 = vadd.f32 %v1290, %v1294
      %v1299 = vadd.f32 %v1291, %v1296
      %v1300 = vsel %vm404, %v1298, 0.0
      %v1301 = vrot.slane %v1300, 4
      %v1302 = vadd.f32 %v1300, %v1301
      %v1303 = vrot.slane %v1302, 2
      %v1304 = vadd.f32 %v1302, %v1303
      %v1305 = vrot.slane %v1304, 1
      %v1306 = vadd.f32 %v1304, %v1305
      %v1307 = vsel %vm404, %v1299, 0.0
      %v1308 = vrot.slane %v1307, 4
      %v1309 = vadd.f32 %v1307, %v1308
      %v1310 = vrot.slane %v1309, 2
      %v1311 = vadd.f32 %v1309, %v1310
      %v1312 = vrot.slane %v1311, 1
      %v1313 = vadd.f32 %v1311, %v1312
      %v1314 = vrcp.pop 4.0
      %v1315 = vmul.f32 %v1306, %v1314
      %v1316 = vmul.f32 %v1313, %v1314
      %v1317 = vsel %vm404, %v1298, -inf
      %v1318 = vrot.slane %v1317, 4
      %v1319 = vmax.f32 %v1317, %v1318
      %v1320 = vrot.slane %v1319, 2
      %v1321 = vmax.f32 %v1319, %v1320
      %v1322 = vrot.slane %v1321, 1
      %v1323 = vmax.f32 %v1321, %v1322
      %v1324 = vsel %vm404, %v1299, -inf
      %v1325 = vrot.slane %v1324, 4
      %v1326 = vmax.f32 %v1324, %v1325
      %v1327 = vrot.slane %v1326, 2
      %v1328 = vmax.f32 %v1326, %v1327
      %v1329 = vrot.slane %v1328, 1
      %v1330 = vmax.f32 %v1328, %v1329
      %v1331 = vld [vmem:[%s6] sm:$0xff]
      %v1332 = vld [vmem:[%s6 + $0x8] sm:$0xff]
      %v1333 = vld [vmem:[%s6 + $0x10] sm:$0xff]
      %v1334 = vld [vmem:[%s6 + $0x18] sm:$0xff]
      %v1335 = vld [vmem:[%s6 + $0x20] sm:$0xff]
      %v1336 = vld [vmem:[%s6 + $0x28] sm:$0xff]
      %v1337 = vld [vmem:[%s6 + $0x30] sm:$0xff]
      %v1338 = vld [vmem:[%s6 + $0x38] sm:$0xff]
      %v1339 = vld [vmem:[%s6 + $0x40] sm:$0xff]
      %v1340 = vld [vmem:[%s6 + $0x48] sm:$0xff]
      %v1341 = vld [vmem:[%s6 + $0x50] sm:$0xff]
      %v1342 = vld [vmem:[%s6 + $0x58] sm:$0xff]
      %v1343 = vld [vmem:[%s6 + $0x60] sm:$0xff]
      %v1344 = vld [vmem:[%s6 + $0x68] sm:$0xff]
      %v1345 = vld [vmem:[%s6 + $0x70] sm:$0xff]
      %v1346 = vld [vmem:[%s6 + $0x78] sm:$0xff]
      %v1347 = vld [vmem:[%s6 + $0x80] sm:$0xff]
      %v1348 = vld [vmem:[%s6 + $0x88] sm:$0xff]
      %v1349 = vld [vmem:[%s6 + $0x90] sm:$0xff]
      %v1350 = vld [vmem:[%s6 + $0x98] sm:$0xff]
      %v1351 = vld [vmem:[%s6 + $0xa0] sm:$0xff]
      %v1352 = vld [vmem:[%s6 + $0xa8] sm:$0xff]
      %v1353 = vld [vmem:[%s6 + $0xb0] sm:$0xff]
      %v1354 = vld [vmem:[%s6 + $0xb8] sm:$0xff]
      %v1355 = vld [vmem:[%s6 + $0xc0] sm:$0xff]
      %v1356 = vld [vmem:[%s6 + $0xc8] sm:$0xff]
      %v1357 = vld [vmem:[%s6 + $0xd0] sm:$0xff]
      %v1358 = vld [vmem:[%s6 + $0xd8] sm:$0xff]
      %v1359 = vld [vmem:[%s6 + $0xe0] sm:$0xff]
      %v1360 = vld [vmem:[%s6 + $0xe8] sm:$0xff]
      %v1361 = vld [vmem:[%s6 + $0xf0] sm:$0xff]
      %v1362 = vld [vmem:[%s6 + $0xf8] sm:$0xff]
      %v1363 = vld [vmem:[%s6 + $0x100] sm:$0xff]
      %v1364 = vld [vmem:[%s6 + $0x108] sm:$0xff]
      %v1365 = vld [vmem:[%s6 + $0x110] sm:$0xff]
      %v1366 = vld [vmem:[%s6 + $0x118] sm:$0xff]
      %v1367 = vld [vmem:[%s6 + $0x120] sm:$0xff]
      %v1368 = vld [vmem:[%s6 + $0x128] sm:$0xff]
      %v1369 = vld [vmem:[%s6 + $0x130] sm:$0xff]
      %v1370 = vld [vmem:[%s6 + $0x138] sm:$0xff]
      %v1371 = vld [vmem:[%s6 + $0x140] sm:$0xff]
      %v1372 = vld [vmem:[%s6 + $0x148] sm:$0xff]
      %v1373 = vld [vmem:[%s6 + $0x150] sm:$0xff]
      %v1374 = vld [vmem:[%s6 + $0x158] sm:$0xff]
      %v1375 = vld [vmem:[%s6 + $0x160] sm:$0xff]
      %v1376 = vld [vmem:[%s6 + $0x168] sm:$0xff]
      %v1377 = vld [vmem:[%s6 + $0x170] sm:$0xff]
      %v1378 = vld [vmem:[%s6 + $0x178] sm:$0xff]
      %v1379 = vld [vmem:[%s6 + $0x180] sm:$0xff]
      %v1380 = vld [vmem:[%s6 + $0x188] sm:$0xff]
      %v1381 = vld [vmem:[%s6 + $0x190] sm:$0xff]
      %v1382 = vld [vmem:[%s6 + $0x198] sm:$0xff]
      %v1383 = vld [vmem:[%s6 + $0x1a0] sm:$0xff]
      %v1384 = vld [vmem:[%s6 + $0x1a8] sm:$0xff]
      %v1385 = vld [vmem:[%s6 + $0x1b0] sm:$0xff]
      %v1386 = vld [vmem:[%s6 + $0x1b8] sm:$0xff]
      %v1387 = vld [vmem:[%s6 + $0x1c0] sm:$0xff]
      %v1388 = vld [vmem:[%s6 + $0x1c8] sm:$0xff]
      %v1389 = vld [vmem:[%s6 + $0x1d0] sm:$0xff]
      %v1390 = vld [vmem:[%s6 + $0x1d8] sm:$0xff]
      %v1391 = vld [vmem:[%s6 + $0x1e0] sm:$0xff]
      %v1392 = vld [vmem:[%s6 + $0x1e8] sm:$0xff]
      %v1393 = vld [vmem:[%s6 + $0x1f0] sm:$0xff]
      %v1394 = vld [vmem:[%s6 + $0x1f8] sm:$0xff]
      %v1395 = vld [vmem:[%s6 + $0x200] sm:$0xff]
      %v1396 = vld [vmem:[%s6 + $0x208] sm:$0xff]
      %v1397 = vld [vmem:[%s6 + $0x210] sm:$0xff]
      %v1398 = vld [vmem:[%s6 + $0x218] sm:$0xff]
      %v1399 = vld [vmem:[%s6 + $0x220] sm:$0xff]
      %v1400 = vld [vmem:[%s6 + $0x228] sm:$0xff]
      %v1401 = vld [vmem:[%s6 + $0x230] sm:$0xff]
      %v1402 = vld [vmem:[%s6 + $0x238] sm:$0xff]
      %v1403 = vld [vmem:[%s6 + $0x240] sm:$0xff]
      %v1404 = vld [vmem:[%s6 + $0x248] sm:$0xff]
      %v1405 = vld [vmem:[%s6 + $0x250] sm:$0xff]
      %v1406 = vld [vmem:[%s6 + $0x258] sm:$0xff]
      %v1407 = vld [vmem:[%s6 + $0x260] sm:$0xff]
      %v1408 = vld [vmem:[%s6 + $0x268] sm:$0xff]
      %v1409 = vld [vmem:[%s6 + $0x270] sm:$0xff]
      %v1410 = vld [vmem:[%s6 + $0x278] sm:$0xff]
      %v1411 = vld [vmem:[%s6 + $0x280] sm:$0xff]
      %v1412 = vld [vmem:[%s6 + $0x288] sm:$0xff]
      %v1413 = vld [vmem:[%s6 + $0x290] sm:$0xff]
      %v1414 = vld [vmem:[%s6 + $0x298] sm:$0xff]
      %v1415 = vld [vmem:[%s6 + $0x2a0] sm:$0xff]
      %v1416 = vld [vmem:[%s6 + $0x2a8] sm:$0xff]
      %v1417 = vld [vmem:[%s6 + $0x2b0] sm:$0xff]
      %v1418 = vld [vmem:[%s6 + $0x2b8] sm:$0xff]
      %v1419 = vld [vmem:[%s6 + $0x2c0] sm:$0xff]
      %v1420 = vld [vmem:[%s6 + $0x2c8] sm:$0xff]
      %v1421 = vld [vmem:[%s6 + $0x2d0] sm:$0xff]
      %v1422 = vld [vmem:[%s6 + $0x2d8] sm:$0xff]
      %v1423 = vld [vmem:[%s6 + $0x2e0] sm:$0xff]
      %v1424 = vld [vmem:[%s6 + $0x2e8] sm:$0xff]
      %v1425 = vld [vmem:[%s6 + $0x2f0] sm:$0xff]
      %v1426 = vld [vmem:[%s6 + $0x2f8] sm:$0xff]
      %v1427 = vld [vmem:[%s6 + $0x300] sm:$0xff]
      %v1428 = vld [vmem:[%s6 + $0x308] sm:$0xff]
      %v1429 = vld [vmem:[%s6 + $0x310] sm:$0xff]
      %v1430 = vld [vmem:[%s6 + $0x318] sm:$0xff]
      %v1431 = vld [vmem:[%s6 + $0x320] sm:$0xff]
      %v1432 = vld [vmem:[%s6 + $0x328] sm:$0xff]
      %v1433 = vld [vmem:[%s6 + $0x330] sm:$0xff]
      %v1434 = vld [vmem:[%s6 + $0x338] sm:$0xff]
      %v1435 = vld [vmem:[%s6 + $0x340] sm:$0xff]
      %v1436 = vld [vmem:[%s6 + $0x348] sm:$0xff]
      %v1437 = vld [vmem:[%s6 + $0x350] sm:$0xff]
      %v1438 = vld [vmem:[%s6 + $0x358] sm:$0xff]
      %v1439 = vld [vmem:[%s6 + $0x360] sm:$0xff]
      %v1440 = vld [vmem:[%s6 + $0x368] sm:$0xff]
      %v1441 = vld [vmem:[%s6 + $0x370] sm:$0xff]
      %v1442 = vld [vmem:[%s6 + $0x378] sm:$0xff]
      %v1443 = vld [vmem:[%s6 + $0x380] sm:$0xff]
      %v1444 = vld [vmem:[%s6 + $0x388] sm:$0xff]
      %v1445 = vld [vmem:[%s6 + $0x390] sm:$0xff]
      %v1446 = vld [vmem:[%s6 + $0x398] sm:$0xff]
      %v1447 = vld [vmem:[%s6 + $0x3a0] sm:$0xff]
      %v1448 = vld [vmem:[%s6 + $0x3a8] sm:$0xff]
      %v1449 = vld [vmem:[%s6 + $0x3b0] sm:$0xff]
      %v1450 = vld [vmem:[%s6 + $0x3b8] sm:$0xff]
      %v1451 = vld [vmem:[%s6 + $0x3c0] sm:$0xff]
      %v1452 = vld [vmem:[%s6 + $0x3c8] sm:$0xff]
      %v1453 = vld [vmem:[%s6 + $0x3d0] sm:$0xff]
      %v1454 = vld [vmem:[%s6 + $0x3d8] sm:$0xff]
      %v1455 = vld [vmem:[%s6 + $0x3e0] sm:$0xff]
      %v1456 = vld [vmem:[%s6 + $0x3e8] sm:$0xff]
      %v1457 = vld [vmem:[%s6 + $0x3f0] sm:$0xff]
      %v1458 = vld [vmem:[%s6 + $0x3f8] sm:$0xff]
      %1459 = vmatprep.subr.mxu0 %v1362
      %1460 = vmatpush1.msra.mxu0 %v1361
      %1461 = vmatprep.subr.mxu0 %v1360
      %1462 = vmatpush1.msra.mxu0 %v1359
      %1463 = vmatprep.subr.mxu0 %v1358
      %1464 = vmatpush1.msra.mxu0 %v1357
      %1465 = vmatprep.subr.mxu0 %v1356
      %1466 = vmatpush1.msra.mxu0 %v1355
      %1467 = vmatprep.subr.mxu0 %v1354
      %1468 = vmatpush1.msra.mxu0 %v1353
      %1469 = vmatprep.subr.mxu0 %v1352
      %1470 = vmatpush1.msra.mxu0 %v1351
      %1471 = vmatprep.subr.mxu0 %v1350
      %1472 = vmatpush1.msra.mxu0 %v1349
      %1473 = vmatprep.subr.mxu0 %v1348
      %1474 = vmatpush1.msra.mxu0 %v1347
      %1475 = vmatprep.subr.mxu0 %v1346
      %1476 = vmatpush1.msra.mxu0 %v1345
      %1477 = vmatprep.subr.mxu0 %v1344
      %1478 = vmatpush1.msra.mxu0 %v1343
      %1479 = vmatprep.subr.mxu0 %v1342
      %1480 = vmatpush1.msra.mxu0 %v1341
      %1481 = vmatprep.subr.mxu0 %v1340
      %1482 = vmatpush1.msra.mxu0 %v1339
      %1483 = vmatprep.subr.mxu0 %v1338
      %1484 = vmatpush1.msra.mxu0 %v1337
      %1485 = vmatprep.subr.mxu0 %v1336
      %1486 = vmatpush1.msra.mxu0 %v1335
      %1487 = vmatprep.subr.mxu0 %v1334
      %1488 = vmatpush1.msra.mxu0 %v1333
      %1489 = vmatprep.subr.mxu0 %v1332
      %1490 = vmatpush1.msra.mxu0 %v1331
      %1491 = vmatprep.subr.mxu0 %v1394
      %1492 = vmatpush2.msra.mxu0 %v1393
      %1493 = vmatprep.subr.mxu0 %v1392
      %1494 = vmatpush2.msra.mxu0 %v1391
      %1495 = vmatprep.subr.mxu0 %v1390
      %1496 = vmatpush2.msra.mxu0 %v1389
      %1497 = vmatprep.subr.mxu0 %v1388
      %1498 = vmatpush2.msra.mxu0 %v1387
      %1499 = vmatprep.subr.mxu0 %v1386
      %1500 = vmatpush2.msra.mxu0 %v1385
      %1501 = vmatprep.subr.mxu0 %v1384
      %1502 = vmatpush2.msra.mxu0 %v1383
      %1503 = vmatprep.subr.mxu0 %v1382
      %1504 = vmatpush2.msra.mxu0 %v1381
      %1505 = vmatprep.subr.mxu0 %v1380
      %1506 = vmatpush2.msra.mxu0 %v1379
      %1507 = vmatprep.subr.mxu0 %v1378
      %1508 = vmatpush2.msra.mxu0 %v1377
      %1509 = vmatprep.subr.mxu0 %v1376
      %1510 = vmatpush2.msra.mxu0 %v1375
      %1511 = vmatprep.subr.mxu0 %v1374
      %1512 = vmatpush2.msra.mxu0 %v1373
      %1513 = vmatprep.subr.mxu0 %v1372
      %1514 = vmatpush2.msra.mxu0 %v1371
      %1515 = vmatprep.subr.mxu0 %v1370
      %1516 = vmatpush2.msra.mxu0 %v1369
      %1517 = vmatprep.subr.mxu0 %v1368
      %1518 = vmatpush2.msra.mxu0 %v1367
      %1519 = vmatprep.subr.mxu0 %v1366
      %1520 = vmatpush2.msra.mxu0 %v1365
      %1521 = vmatprep.subr.mxu0 %v1364
      %1522 = vmatpush2.msra.mxu0 %v1363
      %1523 = vmatprep.mubr.f32.mxu0 %v1316
      %1524 = vmatmul.mubr.f32.gmra.mxu0 %v1315
      %v1525 = vpop.f32.mrf.mxu0
      %v1526 = vadd.f32 0.0, %v1525
      %v1527 = vpop.f32.mrf.mxu0
      %v1528 = vadd.f32 0.0, %v1527
      %1529 = vdwg.mxu0
      %1530 = vmatprep.subr.mxu0 %v1426
      %1531 = vmatpush1.msra.mxu0 %v1425
      %1532 = vmatprep.subr.mxu0 %v1424
      %1533 = vmatpush1.msra.mxu0 %v1423
      %1534 = vmatprep.subr.mxu0 %v1422
      %1535 = vmatpush1.msra.mxu0 %v1421
      %1536 = vmatprep.subr.mxu0 %v1420
      %1537 = vmatpush1.msra.mxu0 %v1419
      %1538 = vmatprep.subr.mxu0 %v1418
      %1539 = vmatpush1.msra.mxu0 %v1417
      %1540 = vmatprep.subr.mxu0 %v1416
      %1541 = vmatpush1.msra.mxu0 %v1415
      %1542 = vmatprep.subr.mxu0 %v1414
      %1543 = vmatpush1.msra.mxu0 %v1413
      %1544 = vmatprep.subr.mxu0 %v1412
      %1545 = vmatpush1.msra.mxu0 %v1411
      %1546 = vmatprep.subr.mxu0 %v1410
      %1547 = vmatpush1.msra.mxu0 %v1409
      %1548 = vmatprep.subr.mxu0 %v1408
      %1549 = vmatpush1.msra.mxu0 %v1407
      %1550 = vmatprep.subr.mxu0 %v1406
      %1551 = vmatpush1.msra.mxu0 %v1405
      %1552 = vmatprep.subr.mxu0 %v1404
      %1553 = vmatpush1.msra.mxu0 %v1403
      %1554 = vmatprep.subr.mxu0 %v1402
      %1555 = vmatpush1.msra.mxu0 %v1401
      %1556 = vmatprep.subr.mxu0 %v1400
      %1557 = vmatpush1.msra.mxu0 %v1399
      %1558 = vmatprep.subr.mxu0 %v1398
      %1559 = vmatpush1.msra.mxu0 %v1397
      %1560 = vmatprep.subr.mxu0 %v1396
      %1561 = vmatpush1.msra.mxu0 %v1395
      %1562 = vmatprep.subr.mxu0 %v1458
      %1563 = vmatpush2.msra.mxu0 %v1457
      %1564 = vmatprep.subr.mxu0 %v1456
      %1565 = vmatpush2.msra.mxu0 %v1455
      %1566 = vmatprep.subr.mxu0 %v1454
      %1567 = vmatpush2.msra.mxu0 %v1453
      %1568 = vmatprep.subr.mxu0 %v1452
      %1569 = vmatpush2.msra.mxu0 %v1451
      %1570 = vmatprep.subr.mxu0 %v1450
      %1571 = vmatpush2.msra.mxu0 %v1449
      %1572 = vmatprep.subr.mxu0 %v1448
      %1573 = vmatpush2.msra.mxu0 %v1447
      %1574 = vmatprep.subr.mxu0 %v1446
      %1575 = vmatpush2.msra.mxu0 %v1445
      %1576 = vmatprep.subr.mxu0 %v1444
      %1577 = vmatpush2.msra.mxu0 %v1443
      %1578 = vmatprep.subr.mxu0 %v1442
      %1579 = vmatpush2.msra.mxu0 %v1441
      %1580 = vmatprep.subr.mxu0 %v1440
      %1581 = vmatpush2.msra.mxu0 %v1439
      %1582 = vmatprep.subr.mxu0 %v1438
      %1583 = vmatpush2.msra.mxu0 %v1437
      %1584 = vmatprep.subr.mxu0 %v1436
      %1585 = vmatpush2.msra.mxu0 %v1435
      %1586 = vmatprep.subr.mxu0 %v1434
      %1587 = vmatpush2.msra.mxu0 %v1433
      %1588 = vmatprep.subr.mxu0 %v1432
      %1589 = vmatpush2.msra.mxu0 %v1431
      %1590 = vmatprep.subr.mxu0 %v1430
      %1591 = vmatpush2.msra.mxu0 %v1429
      %1592 = vmatprep.subr.mxu0 %v1428
      %1593 = vmatpush2.msra.mxu0 %v1427
      %1594 = vmatprep.mubr.f32.mxu0 %v1330
      %1595 = vmatmul.mubr.f32.gmra.mxu0 %v1323
      %v1596 = vpop.f32.mrf.mxu0
      %v1597 = vadd.f32 %v1526, %v1596
      %v1598 = vpop.f32.mrf.mxu0
      %v1599 = vadd.f32 %v1528, %v1598
      %1600 = vdwg.mxu0
      %v1601 = vxor.u32 %v1597, 2147483648
      %v1602 = vxor.u32 %v1599, 2147483648
      %v1603 = vmul.f32 %v1601, 1.442695
      %v1604 = vpow.pop %v1603
      %v1605 = vmul.f32 %v1602, 1.442695
      %v1606 = vpow.pop %v1605
      %v1607 = vadd.f32 %v1604, 1.0
      %v1608 = vadd.f32 %v1606, 1.0
      %v1609 = vrcp.pop %v1607
      %v1610 = vmul.f32 1.0, %v1609
      %v1611 = vrcp.pop %v1608
      %v1612 = vmul.f32 1.0, %v1611
      %v1613 = vlaneseq
      %v1614 = vshrl.u32 %v1613, 7
      %v1615 = vsub.s32 0, %v1614
      %v1616 = vrot.slane %v1610, %v1615
      %v1617 = vlaneseq
      %v1618 = vshrl.u32 %v1617, 7
      %v1619 = vsub.s32 0, %v1618
      %v1620 = vrot.slane %v1612, %v1619
      %v1621 = vmul.f32 %v1298, %v1616
      %v1622 = vmul.f32 %v1299, %v1620
      %v1625 = vcombine.low %v1621, %v1622
      %1627 = vst [vmem:[%s279] sm:$0xff] %v1625
      %p1628 = scmp.lt.s32.totalorder %s19, 1
      %s1629 = scalar_select %p1628, %s19, 1
      %s1630 = smul.addr %s1629, 2
      %s1631 = smul.addr %s1630, 4
      %s1632 = scalar_lea.vmem %s7, %s1631
      // Predicated region
      $region56: #{reinforce_attention.1} parent=47 // pred_check
        %p1633 = pneg %p189
      $region57: #{reinforce_attention.1} parent=47 // pred_check_branch
        %1635 = sbr.rel (%p1633) target = $region59
      $region58: #{reinforce_attention.1} parent=47 // pred_region
        _
      $region59: #{reinforce_attention.1} parent=47 // pred_fallthru
        _
    $region48: #{reinforce_attention.1} parent=5 // pred_fallthru
      _
    %p1636 = scmp.le.s32.totalorder 2, %s14
    // Predicated region
    $region60: #{reinforce_attention.1} parent=5 // pred_check
      %p1637 = pneg %p1636
    $region61: #{reinforce_attention.1} parent=5 // pred_check_branch
      %1639 = sbr.rel (%p1637) target = $region63
    $region62: #{reinforce_attention.1} parent=5 // pred_region
      %s1640 = ssub.s32 %s14, 2
      // Predicated region
      $region64: #{reinforce_attention.1} parent=62 // pred_check
        %p1641 = pneg %p195
      $region65: #{reinforce_attention.1} parent=62 // pred_check_branch
        %1643 = sbr.rel (%p1641) target = $region67
      $region66: #{reinforce_attention.1} parent=62 // pred_region
        %p1644 = scmp.lt.s32.totalorder %s20, 1
        %s1645 = scalar_select %p1644, %s20, 1
        %s1646 = smul.addr %s1645, 2
        %s1647 = smul.addr %s1646, 4
        %s1648 = scalar_lea.vmem %s7, %s1647
      $region67: #{reinforce_attention.1} parent=62 // pred_fallthru
        _
    $region63: #{reinforce_attention.1} parent=5 // pred_fallthru
      _
  $region6: #{reinforce_attention.1} parent=0 // loop_footer
    %s18 = sadd.s32 1, %s14
  $region7: #{reinforce_attention.1} parent=0 // loop_footer_branch
    %13 = sbr.rel target = $region3
  $region8: #{reinforce_attention.1} parent=0 // loop_exit
    _

</llo_original>
